<compile_context>
chip_gen: v7x
topology: tpu7x:2x2x1
jax: 0.10.0
libtpu: 0.0.40
codegen_flags: <defaults>
</compile_context>

<pallas_src>
import math
import jax
import jax.numpy as jnp
from jax.experimental import pallas as pl
from jax.experimental.pallas import tpu as pltpu

COMPUTE_DTYPE = jnp.bfloat16          # MXU input dtype; accumulation is f32

_TPU_DEFAULTS = None


def _tpu_defaults():
    """Generation-aware tile / scoped-VMEM defaults.

    v5e / v6e (128 MiB physical VMEM, lower HBM BW): big 512 tiles + 64 MiB cap.
    v7x (64 MiB per TensorCore, 3.2 TB/s HBM): hold tiles at 256, cap at 40 MiB.
    """
    global _TPU_DEFAULTS
    if _TPU_DEFAULTS is None:
        try:
            vmem = int(pltpu.get_tpu_info().vmem_capacity_bytes)
        except Exception:
            vmem = 64 * 1024 * 1024
        if vmem >= 96 * 1024 * 1024:
            _TPU_DEFAULTS = dict(vmem_limit=64 * 1024 * 1024, tile=512)
        else:
            _TPU_DEFAULTS = dict(vmem_limit=40 * 1024 * 1024, tile=256)
    return _TPU_DEFAULTS


def _pick_tile(dim, want):
    """Largest tile <= `want` that evenly divides `dim` (falls back to dim)."""
    if dim <= want:
        return dim
    t = want
    while t >= 128:
        if dim % t == 0:
            return t
        t //= 2
    return dim


# ----------------------------- fused tiled GEMM -----------------------------

def _make_linear_kernel(has_ln, has_bias, gelu, has_res):
    """GEMM kernel with LN prologue cached per row tile and a fused
    bias / tanh-GELU / residual epilogue.  No k-loop: K is one MXU tile."""

    def kernel(*refs):
        it = iter(refs)
        x_ref = next(it)
        w_ref = next(it)
        g_ref = next(it) if has_ln else None
        gb_ref = next(it) if has_ln else None
        b_ref = next(it) if has_bias else None
        r_ref = next(it) if has_res else None
        o_ref = next(it)
        xn_ref = next(it) if has_ln else None

        if has_ln:
            # LayerNorm is computed once per row tile (j == 0) and cached in a
            # bf16 VMEM scratch.  The x block index is j-invariant (stays
            # resident) and the j axis is "arbitrary", so this is ordered.
            @pl.when(pl.program_id(1) == 0)
            def _():
                xf = x_ref[...].astype(jnp.float32)
                mu = jnp.mean(xf, axis=-1, keepdims=True)
                var = jnp.mean(jnp.square(xf - mu), axis=-1, keepdims=True)
                xf = (xf - mu) * jax.lax.rsqrt(var + 1e-5)
                xf = (xf * g_ref[...].astype(jnp.float32)
                      + gb_ref[...].astype(jnp.float32))
                xn_ref[...] = xf.astype(xn_ref.dtype)

            x = xn_ref[...]
        else:
            x = x_ref[...].astype(w_ref.dtype)

        # Single MXU contraction (K untiled) -> f32; epilogue straight to o_ref
        # (no f32 accumulator scratch round-trip).
        y = jnp.dot(x, w_ref[...], preferred_element_type=jnp.float32)
        if has_bias:
            y = y + b_ref[...].astype(jnp.float32)
        if gelu:
            # GELU(approximate='tanh'), computed in f32.
            c = 0.7978845608028654  # sqrt(2/pi)
            y = 0.5 * y * (1.0 + jnp.tanh(c * (y + 0.044715 * y * y * y)))
        if has_res:
            y = y + r_ref[...].astype(jnp.float32)
        o_ref[...] = y.astype(o_ref.dtype)

    return kernel


def fused_linear(x, w, *, bias=None, ln_g=None, ln_b=None, gelu=False,
                 residual=None, out_dtype=COMPUTE_DTYPE, tm=None, tn=None):
    """y = [residual +] [gelu](LN?(x) @ w [+ bias]) as one tiled pallas_call.

    Grid is (M//tm, N//tn); K (<= 4*C in this model) is always a single tile.
    """
    M, K = x.shape
    Kw, N = w.shape
    assert K == Kw
    has_ln = ln_g is not None
    has_bias = bias is not None
    has_res = residual is not None

    d = _tpu_defaults()
    tm = _pick_tile(M, tm if tm is not None else d["tile"])
    tn = _pick_tile(N, tn if tn is not None else d["tile"])
    assert M % tm == 0 and N % tn == 0

    grid = (M // tm, N // tn)

    in_specs = [
        pl.BlockSpec((tm, K), lambda i, j: (i, 0)),
        pl.BlockSpec((K, tn), lambda i, j: (0, j)),
    ]
    operands = [x, w]
    if has_ln:
        in_specs += [pl.BlockSpec((1, K), lambda i, j: (0, 0))] * 2
        operands += [ln_g.reshape(1, K), ln_b.reshape(1, K)]
    if has_bias:
        in_specs.append(pl.BlockSpec((1, tn), lambda i, j: (0, j)))
        operands.append(bias.reshape(1, N))
    if has_res:
        in_specs.append(pl.BlockSpec((tm, tn), lambda i, j: (i, j)))
        operands.append(residual)

    scratch = [pltpu.VMEM((tm, K), COMPUTE_DTYPE)] if has_ln else []
    # j must be "arbitrary" when the LN cache is live so j==0 runs first for
    # each row tile; the i (row) axis is always "parallel" (megacore sharding).
    semantics = ("parallel", "arbitrary") if has_ln else ("parallel", "parallel")

    return pl.pallas_call(
        _make_linear_kernel(has_ln, has_bias, gelu, has_res),
        grid=grid,
        in_specs=in_specs,
        out_specs=pl.BlockSpec((tm, tn), lambda i, j: (i, j)),
        out_shape=jax.ShapeDtypeStruct((M, N), out_dtype),
        scratch_shapes=scratch,
        compiler_params=pltpu.CompilerParams(
            dimension_semantics=semantics,
            vmem_limit_bytes=d["vmem_limit"]),
    )(*operands)


# ----------------------------- attention -----------------------------

def _head_block(n_head, head_dim):
    """Smallest head-block size hb (dividing n_head) with hb*head_dim a
    multiple of 128, so matmuls/stores are lane-dense.  None if impossible."""
    for hb in range(1, n_head + 1):
        if n_head % hb == 0 and (hb * head_dim) % 128 == 0:
            return hb
    return None


def _make_flash_attention_kernel(hb, head_dim, T, tkv):
    scale = 1.0 / math.sqrt(head_dim)
    hbd = hb * head_dim

    def kernel(q_ref, k_ref, v_ref, o_ref, m_sc, l_sc, acc_sc):
        kv = pl.program_id(2)

        @pl.when(kv == 0)
        def _():
            m_sc[...] = jnp.full_like(m_sc, -jnp.inf)
            l_sc[...] = jnp.zeros_like(l_sc)
            acc_sc[...] = jnp.zeros_like(acc_sc)

        # Fold 1/sqrt(D) into q (T*hbd mults) instead of scaling (T, T) scores.
        q = (q_ref[0].astype(jnp.float32) * scale).astype(k_ref.dtype)
        q = q.reshape(T, hb, head_dim)
        k = k_ref[0].reshape(tkv, hb, head_dim)
        v = v_ref[0].reshape(tkv, hb, head_dim)

        s = jnp.einsum('qhd,khd->hqk', q, k,
                       preferred_element_type=jnp.float32)       # (hb, T, tkv)
        # Reference masked_fill indexes scalar bias[:, :, T, T] == 1, so the
        # causal mask is a no-op; online softmax over the full row (f32 stats).
        m_prev = m_sc[...]
        m_new = jnp.maximum(m_prev, s.max(axis=-1, keepdims=True))
        alpha = jnp.exp(m_prev - m_new)
        p = jnp.exp(s - m_new)
        l_sc[...] = alpha * l_sc[...] + p.sum(axis=-1, keepdims=True)
        acc_sc[...] = alpha * acc_sc[...] + jnp.einsum(
            'hqk,khd->hqd', p.astype(v.dtype), v,
            preferred_element_type=jnp.float32)
        m_sc[...] = m_new

        @pl.when(kv == pl.num_programs(2) - 1)
        def _():
            out = acc_sc[...] * pl.reciprocal(l_sc[...], approx=True)
            # (hb, T, D) -> (T, hb*D): one lane-dense (>=128-wide) store.
            o_ref[0] = out.transpose(1, 0, 2).reshape(T, hbd).astype(o_ref.dtype)

    return kernel


def _make_small_attention_kernel(n_head, head_dim, T):
    """Fallback for tiny/unaligned configs (e.g. C < 128): all heads in one
    batched einsum over the full (T, 3C) slab — no per-head Python unroll."""
    scale = 1.0 / math.sqrt(head_dim)
    C = n_head * head_dim

    def kernel(qkv_ref, o_ref):
        qkv = qkv_ref[0]                                        # (T, 3C)
        q = (qkv[:, :C].astype(jnp.float32) * scale).astype(qkv.dtype)
        q = q.reshape(T, n_head, head_dim)
        k = qkv[:, C:2 * C].reshape(T, n_head, head_dim)
        v = qkv[:, 2 * C:].reshape(T, n_head, head_dim)
        s = jnp.einsum('qhd,khd->hqk', q, k,
                       preferred_element_type=jnp.float32)      # (H, T, T)
        m = s.max(axis=-1, keepdims=True)
        e = jnp.exp(s - m)
        p = e * pl.reciprocal(e.sum(axis=-1, keepdims=True), approx=True)
        o = jnp.einsum('hqk,khd->hqd', p.astype(v.dtype), v,
                       preferred_element_type=jnp.float32)      # (H, T, D)
        o_ref[0] = o.transpose(1, 0, 2).reshape(T, C).astype(o_ref.dtype)

    return kernel


def attention(qkv, n_head):
    """Self-attention on the fused (B, T, 3C) QKV slab -> (B, T, C).

    Fast path: grid = (B, head_blocks, kv_tiles).  Per step, hb heads (with
    hb*head_dim a multiple of 128) get their q / k-tile / v-tile delivered via
    BlockSpecs straight from the slab, online-softmax accumulators live in
    VMEM scratch, and the output is one lane-dense (T, hb*D) tile — VMEM stays
    O(T*hb*D + hb*T*tkv) regardless of sequence length.
    """
    B, T, C3 = qkv.shape
    C = C3 // 3
    head_dim = C // n_head
    d = _tpu_defaults()
    hb = _head_block(n_head, head_dim)

    if hb is not None and T % 8 == 0:
        G = n_head // hb                  # head-blocks per q/k/v region
        hbd = hb * head_dim
        tkv = _pick_tile(T, 256)
        return pl.pallas_call(
            _make_flash_attention_kernel(hb, head_dim, T, tkv),
            grid=(B, G, T // tkv),
            in_specs=[
                pl.BlockSpec((1, T, hbd), lambda b, g, kv: (b, 0, g)),
                pl.BlockSpec((1, tkv, hbd), lambda b, g, kv: (b, kv, G + g)),
                pl.BlockSpec((1, tkv, hbd), lambda b, g, kv: (b, kv, 2 * G + g)),
            ],
            out_specs=pl.BlockSpec((1, T, hbd), lambda b, g, kv: (b, 0, g)),
            out_shape=jax.ShapeDtypeStruct((B, T, C), qkv.dtype),
            scratch_shapes=[
                pltpu.VMEM((hb, T, 1), jnp.float32),           # running max
                pltpu.VMEM((hb, T, 1), jnp.float32),           # running denom
                pltpu.VMEM((hb, T, head_dim), jnp.float32),    # output accum
            ],
            compiler_params=pltpu.CompilerParams(
                dimension_semantics=("parallel", "parallel", "arbitrary"),
                vmem_limit_bytes=d["vmem_limit"]),
        )(qkv, qkv, qkv)

    # TODO(synk): fallback materializes the full (H, T, T) scores; it is only
    # reached for tiny / lane-unaligned head widths where that is cheap.
    return pl.pallas_call(
        _make_small_attention_kernel(n_head, head_dim, T),
        grid=(B,),
        in_specs=[pl.BlockSpec((1, T, C3), lambda b: (b, 0, 0))],
        out_specs=pl.BlockSpec((1, T, C), lambda b: (b, 0, 0)),
        out_shape=jax.ShapeDtypeStruct((B, T, C), qkv.dtype),
        compiler_params=pltpu.CompilerParams(
            dimension_semantics=("parallel",),
            vmem_limit_bytes=d["vmem_limit"]),
    )(qkv)


# ----------------------------- model (glue in JAX) -----------------------------

def init_params(key, config):
    C = config["n_embed"]
    V = config["vocab_size"]
    BS = config["block_size"]
    L = config["n_layer"]
    V_pad = ((V + 127) // 128) * 128   # lane-aligned vocab for the lm_head GEMM

    def nrm(k, shape):
        return (0.02 * jax.random.normal(k, shape, dtype=jnp.float32)).astype(COMPUTE_DTYPE)

    keys = iter(jax.random.split(key, 3 + 4 * L))
    lm_w = 0.02 * jax.random.normal(next(keys), (C, V), dtype=jnp.float32)
    lm_w = jnp.pad(lm_w, ((0, 0), (0, V_pad - V))).astype(COMPUTE_DTYPE)

    params = {
        "wte": nrm(next(keys), (V, C)),
        "wpe": nrm(next(keys), (BS, C)),
        "lnf_g": jnp.ones((C,), jnp.float32),
        "lnf_b": jnp.zeros((C,), jnp.float32),
        "lm_head": lm_w,                        # (C, V_pad), == torch W.T padded
        "blocks": [],
    }
    for _ in range(L):
        blk = {
            "ln1_g": jnp.ones((C,), jnp.float32),
            "ln1_b": jnp.zeros((C,), jnp.float32),
            "attn_w": nrm(next(keys), (C, 3 * C)),
            "attn_b": jnp.zeros((3 * C,), jnp.float32),
            "proj_w": nrm(next(keys), (C, C)),
            "proj_b": jnp.zeros((C,), jnp.float32),
            "ln2_g": jnp.ones((C,), jnp.float32),
            "ln2_b": jnp.zeros((C,), jnp.float32),
            "fc_w": nrm(next(keys), (C, 4 * C)),
            "fc_b": jnp.zeros((4 * C,), jnp.float32),
            "mproj_w": nrm(next(keys), (4 * C, C)),
            "mproj_b": jnp.zeros((C,), jnp.float32),
        }
        params["blocks"].append(blk)
    return params


def gpt_forward(params, idx, config):
    B, T = idx.shape
    C = config["n_embed"]
    H = config["n_head"]
    V = config["vocab_size"]
    assert T <= config["block_size"]

    # Embedding lookups are gathers -> kept as plain-JAX glue.
    tok = jnp.take(params["wte"], idx, axis=0)            # (B, T, C) bf16
    pos = params["wpe"][:T]                               # (T, C)    bf16
    x = (tok + pos[None, :, :]).astype(COMPUTE_DTYPE).reshape(B * T, C)

    for blk in params["blocks"]:
        # --- attention sub-block: LN1 fused into QKV GEMM, residual into proj ---
        qkv = fused_linear(x, blk["attn_w"], bias=blk["attn_b"],
                           ln_g=blk["ln1_g"], ln_b=blk["ln1_b"])    # (B*T, 3C)
        y = attention(qkv.reshape(B, T, 3 * C), H).reshape(B * T, C)
        x = fused_linear(y, blk["proj_w"], bias=blk["proj_b"], residual=x)

        # --- MLP sub-block: LN2 + GELU fused into fc GEMM, residual into mproj ---
        h = fused_linear(x, blk["fc_w"], bias=blk["fc_b"],
                         ln_g=blk["ln2_g"], ln_b=blk["ln2_b"], gelu=True)
        x = fused_linear(h, blk["mproj_w"], bias=blk["mproj_b"], residual=x)

    # Final LayerNorm fused into the lm_head GEMM (computed once per row tile
    # via the VMEM cache).  tm is maximized so the big (C, V_pad) weight
    # streams from HBM as few times as possible (once when B*T <= 2048).
    M = B * T
    V_pad = params["lm_head"].shape[1]
    logits = fused_linear(x, params["lm_head"],
                          ln_g=params["lnf_g"], ln_b=params["lnf_b"],
                          out_dtype=jnp.float32,
                          tm=min(M, 2048))                 # (B*T, V_pad) f32
    if V_pad != V:
        # TODO(synk): at real vocab sizes keep V_pad downstream (mask the pad
        # columns in the loss) to avoid this extra HBM pass over the logits.
        logits = logits[:, :V]
    return logits.reshape(B, T, V)


# ----------------------------- main -----------------------------

if __name__ == "__main__":
    config = dict(block_size=16, vocab_size=128, n_layer=2, n_head=2, n_embed=32)
    B, T = 2, 8

    root = jax.random.PRNGKey(0)
    k_params, k_idx = jax.random.split(root)
    params = init_params(k_params, config)
    idx = jax.random.randint(k_idx, (B, T), 0, config["vocab_size"], dtype=jnp.int32)

    fwd = jax.jit(lambda p, i: gpt_forward(p, i, config))
    logits = jax.block_until_ready(fwd(params, idx))

    assert logits.shape == (B, T, config["vocab_size"])
    assert logits.dtype == jnp.float32
    assert bool(jnp.all(jnp.isfinite(logits)))
    print("KERNEL_OK")
</pallas_src>

<mosaic_0001>
module attributes {stable_mosaic.version = 11 : i64} {
  func.func @kernel(%arg0: i32, %arg1: i32, %arg2: memref<16x32xbf16, #tpu.memory_space<vmem>>, %arg3: memref<32x96xbf16, #tpu.memory_space<vmem>>, %arg4: memref<1x32xf32, #tpu.memory_space<vmem>>, %arg5: memref<1x32xf32, #tpu.memory_space<vmem>>, %arg6: memref<1x96xf32, #tpu.memory_space<vmem>>, %arg7: memref<16x96xbf16, #tpu.memory_space<vmem>>, %arg8: memref<16x32xbf16, #tpu.memory_space<vmem>>) attributes {dimension_semantics = [#tpu.dimension_semantics<parallel>, #tpu.dimension_semantics<arbitrary>], iteration_bounds = array<i64: 1, 1>, scalar_prefetch = 0 : i64, scratch_operands = 1 : i64, tpu.core_type = #tpu.core_type<tc>, window_params = [{transform_indices = @transform_0, window_bounds = array<i64: 16, 32>}, {transform_indices = @transform_1, window_bounds = array<i64: 32, 96>}, {pipeline_mode = #tpu.pipeline_mode<synchronous>, transform_indices = @transform_2, window_bounds = array<i64: 1, 32>}, {pipeline_mode = #tpu.pipeline_mode<synchronous>, transform_indices = @transform_3, window_bounds = array<i64: 1, 32>}, {transform_indices = @transform_4, window_bounds = array<i64: 1, 96>}, {transform_indices = @transform_5, window_bounds = array<i64: 16, 96>}]} {
    %c0_i32 = arith.constant 0 : i32
    %0 = arith.cmpi eq, %arg1, %c0_i32 : i32
    %1 = arith.extui %0 : i1 to i32
    %c0_i32_0 = arith.constant 0 : i32
    %2 = arith.cmpi ne, %1, %c0_i32_0 : i32
    scf.if %2 {
      %c0_8 = arith.constant 0 : index
      %c0_9 = arith.constant 0 : index
      %11 = vector.load %arg2[%c0_8, %c0_9] : memref<16x32xbf16, #tpu.memory_space<vmem>>, vector<16x32xbf16>
      %12 = arith.extf %11 : vector<16x32xbf16> to vector<16x32xf32>
      %cst_10 = arith.constant dense<0.000000e+00> : vector<16xf32>
      %13 = vector.multi_reduction <add>, %12, %cst_10 [1] : vector<16x32xf32> to vector<16xf32>
      %14 = vector.shape_cast %13 : vector<16xf32> to vector<16x1xf32>
      %cst_11 = arith.constant 3.200000e+01 : f32
      %15 = vector.broadcast %cst_11 : f32 to vector<16x1xf32>
      %16 = arith.divf %14, %15 : vector<16x1xf32>
      %17 = vector.broadcast %16 : vector<16x1xf32> to vector<16x32xf32>
      %18 = arith.subf %12, %17 : vector<16x32xf32>
      %19 = arith.mulf %18, %18 : vector<16x32xf32>
      %cst_12 = arith.constant dense<0.000000e+00> : vector<16xf32>
      %20 = vector.multi_reduction <add>, %19, %cst_12 [1] : vector<16x32xf32> to vector<16xf32>
      %21 = vector.shape_cast %20 : vector<16xf32> to vector<16x1xf32>
      %cst_13 = arith.constant 3.200000e+01 : f32
      %22 = vector.broadcast %cst_13 : f32 to vector<16x1xf32>
      %23 = arith.divf %21, %22 : vector<16x1xf32>
      %24 = vector.broadcast %16 : vector<16x1xf32> to vector<16x32xf32>
      %25 = arith.subf %12, %24 : vector<16x32xf32>
      %cst_14 = arith.constant 9.99999974E-6 : f32
      %26 = vector.broadcast %cst_14 : f32 to vector<16x1xf32>
      %27 = arith.addf %23, %26 : vector<16x1xf32>
      %28 = math.rsqrt %27 : vector<16x1xf32>
      %29 = vector.broadcast %28 : vector<16x1xf32> to vector<16x32xf32>
      %30 = arith.mulf %25, %29 : vector<16x32xf32>
      %c0_15 = arith.constant 0 : index
      %c0_16 = arith.constant 0 : index
      %31 = vector.load %arg4[%c0_15, %c0_16] : memref<1x32xf32, #tpu.memory_space<vmem>>, vector<1x32xf32>
      %32 = vector.broadcast %31 : vector<1x32xf32> to vector<16x32xf32>
      %33 = arith.mulf %30, %32 : vector<16x32xf32>
      %c0_17 = arith.constant 0 : index
      %c0_18 = arith.constant 0 : index
      %34 = vector.load %arg5[%c0_17, %c0_18] : memref<1x32xf32, #tpu.memory_space<vmem>>, vector<1x32xf32>
      %35 = vector.broadcast %34 : vector<1x32xf32> to vector<16x32xf32>
      %36 = arith.addf %33, %35 : vector<16x32xf32>
      %37 = arith.truncf %36 : vector<16x32xf32> to vector<16x32xbf16>
      %c0_19 = arith.constant 0 : index
      %c0_20 = arith.constant 0 : index
      %38 = vector.load %arg8[%c0_19, %c0_20] : memref<16x32xbf16, #tpu.memory_space<vmem>>, vector<16x32xbf16>
      tpu.vector_store %arg8[%c0_19, %c0_20], %37 {strides = array<i32>} : memref<16x32xbf16, #tpu.memory_space<vmem>>, vector<16x32xbf16>,
    } else {
    }
    %c0 = arith.constant 0 : index
    %c0_1 = arith.constant 0 : index
    %3 = vector.load %arg8[%c0, %c0_1] : memref<16x32xbf16, #tpu.memory_space<vmem>>, vector<16x32xbf16>
    %c0_2 = arith.constant 0 : index
    %c0_3 = arith.constant 0 : index
    %4 = vector.load %arg3[%c0_2, %c0_3] : memref<32x96xbf16, #tpu.memory_space<vmem>>, vector<32x96xbf16>
    %cst = arith.constant dense<0.000000e+00> : vector<16x96xf32>
    %5 = tpu.matmul %3, %4, %cst {dimension_numbers = #tpu.dot_dimension_numbers<[1], [0], [0], [1], [0, 0, 1, 1], [], []>} : vector<16x32xbf16>, vector<32x96xbf16>, vector<16x96xf32> -> vector<16x96xf32>
    %c0_4 = arith.constant 0 : index
    %c0_5 = arith.constant 0 : index
    %6 = vector.load %arg6[%c0_4, %c0_5] : memref<1x96xf32, #tpu.memory_space<vmem>>, vector<1x96xf32>
    %7 = vector.broadcast %6 : vector<1x96xf32> to vector<16x96xf32>
    %8 = arith.addf %5, %7 : vector<16x96xf32>
    %9 = arith.truncf %8 : vector<16x96xf32> to vector<16x96xbf16>
    %c0_6 = arith.constant 0 : index
    %c0_7 = arith.constant 0 : index
    %10 = vector.load %arg7[%c0_6, %c0_7] : memref<16x96xbf16, #tpu.memory_space<vmem>>, vector<16x96xbf16>
    tpu.vector_store %arg7[%c0_6, %c0_7], %9 {strides = array<i32>} : memref<16x96xbf16, #tpu.memory_space<vmem>>, vector<16x96xbf16>,
    return
  }
  func.func @transform_0(%arg0: i32, %arg1: i32) -> (i32, i32) {
    %c0_i32 = arith.constant 0 : i32
    %c0_i32_0 = arith.constant 0 : i32
    return %arg0, %c0_i32 : i32, i32
  }
  func.func @transform_1(%arg0: i32, %arg1: i32) -> (i32, i32) {
    %c0_i32 = arith.constant 0 : i32
    %c0_i32_0 = arith.constant 0 : i32
    return %c0_i32, %arg1 : i32, i32
  }
  func.func @transform_2(%arg0: i32, %arg1: i32) -> (i32, i32) {
    %c0_i32 = arith.constant 0 : i32
    %c0_i32_0 = arith.constant 0 : i32
    %c0_i32_1 = arith.constant 0 : i32
    return %c0_i32, %c0_i32_0 : i32, i32
  }
  func.func @transform_3(%arg0: i32, %arg1: i32) -> (i32, i32) {
    %c0_i32 = arith.constant 0 : i32
    %c0_i32_0 = arith.constant 0 : i32
    %c0_i32_1 = arith.constant 0 : i32
    return %c0_i32, %c0_i32_0 : i32, i32
  }
  func.func @transform_4(%arg0: i32, %arg1: i32) -> (i32, i32) {
    %c0_i32 = arith.constant 0 : i32
    %c0_i32_0 = arith.constant 0 : i32
    return %c0_i32, %arg1 : i32, i32
  }
  func.func @transform_5(%arg0: i32, %arg1: i32) -> (i32, i32) {
    %c0_i32 = arith.constant 0 : i32
    return %arg0, %arg1 : i32, i32
  }
}

module attributes {stable_mosaic.version = 11 : i64} {
  func.func @kernel(%arg0: i32, %arg1: memref<1x8x96xbf16, #tpu.memory_space<vmem>>, %arg2: memref<1x8x32xbf16, #tpu.memory_space<vmem>>) attributes {dimension_semantics = [#tpu.dimension_semantics<parallel>], iteration_bounds = array<i64: 2>, scalar_prefetch = 0 : i64, scratch_operands = 0 : i64, tpu.core_type = #tpu.core_type<tc>, window_params = [{transform_indices = @transform_0, window_bounds = array<i64: 1, 8, 96>}, {transform_indices = @transform_1, window_bounds = array<i64: 1, 8, 32>}]} {
    %c0 = arith.constant 0 : index
    %c0_0 = arith.constant 0 : index
    %c0_1 = arith.constant 0 : index
    %0 = vector.load %arg1[%c0, %c0_0, %c0_1] : memref<1x8x96xbf16, #tpu.memory_space<vmem>>, vector<1x8x96xbf16>
    %1 = vector.shape_cast %0 : vector<1x8x96xbf16> to vector<8x96xbf16>
    %2 = vector.extract_strided_slice %1 {offsets = [0, 0], sizes = [8, 32], strides = [1, 1]} : vector<8x96xbf16> to vector<8x32xbf16>
    %3 = arith.extf %2 : vector<8x32xbf16> to vector<8x32xf32>
    %cst = arith.constant 2.500000e-01 : f32
    %4 = vector.broadcast %cst : f32 to vector<8x32xf32>
    %5 = arith.mulf %3, %4 : vector<8x32xf32>
    %6 = arith.truncf %5 : vector<8x32xf32> to vector<8x32xbf16>
    %7 = vector.shape_cast %6 : vector<8x32xbf16> to vector<8x2x16xbf16>
    %8 = vector.extract_strided_slice %1 {offsets = [0, 32], sizes = [8, 32], strides = [1, 1]} : vector<8x96xbf16> to vector<8x32xbf16>
    %9 = vector.shape_cast %8 : vector<8x32xbf16> to vector<8x2x16xbf16>
    %10 = vector.extract_strided_slice %1 {offsets = [0, 64], sizes = [8, 32], strides = [1, 1]} : vector<8x96xbf16> to vector<8x32xbf16>
    %11 = vector.shape_cast %10 : vector<8x32xbf16> to vector<8x2x16xbf16>
    "tpu.trace_start"() <{level = 10 : i32, message = "qhd,khd->hqk"}> : () -> ()
    %cst_2 = arith.constant dense<0.000000e+00> : vector<2x8x8xf32>
    %12 = tpu.matmul %7, %9, %cst_2 {dimension_numbers = #tpu.dot_dimension_numbers<[2], [2], [0], [0], [0, 1, 0, 0, 1, 0], [1], [1]>} : vector<8x2x16xbf16>, vector<8x2x16xbf16>, vector<2x8x8xf32> -> vector<2x8x8xf32>
    "tpu.trace_stop"() : () -> ()
    %cst_3 = arith.constant dense<0xFF800000> : vector<2x8xf32>
    %13 = vector.multi_reduction <maximumf>, %12, %cst_3 [2] : vector<2x8x8xf32> to vector<2x8xf32>
    %14 = vector.shape_cast %13 : vector<2x8xf32> to vector<2x8x1xf32>
    %15 = vector.broadcast %14 : vector<2x8x1xf32> to vector<2x8x8xf32>
    %16 = arith.subf %12, %15 : vector<2x8x8xf32>
    %17 = math.exp %16 : vector<2x8x8xf32>
    %cst_4 = arith.constant dense<0.000000e+00> : vector<2x8xf32>
    %18 = vector.multi_reduction <add>, %17, %cst_4 [2] : vector<2x8x8xf32> to vector<2x8xf32>
    %19 = vector.shape_cast %18 : vector<2x8xf32> to vector<2x8x1xf32>
    %20 = tpu.reciprocal %19 {approx = true} : vector<2x8x1xf32> -> vector<2x8x1xf32>
    %21 = vector.broadcast %20 : vector<2x8x1xf32> to vector<2x8x8xf32>
    %22 = arith.mulf %17, %21 : vector<2x8x8xf32>
    %23 = arith.truncf %22 : vector<2x8x8xf32> to vector<2x8x8xbf16>
    "tpu.trace_start"() <{level = 10 : i32, message = "hqk,khd->hqd"}> : () -> ()
    %cst_5 = arith.constant dense<0.000000e+00> : vector<2x8x16xf32>
    %24 = tpu.matmul %23, %11, %cst_5 {dimension_numbers = #tpu.dot_dimension_numbers<[2], [0], [1], [2], [0, 0, 0, 1, 1, 2], [0], [1]>} : vector<2x8x8xbf16>, vector<8x2x16xbf16>, vector<2x8x16xf32> -> vector<2x8x16xf32>
    "tpu.trace_stop"() : () -> ()
    %25 = tpu.transpose %24, [1, 0, 2] : vector<2x8x16xf32> -> vector<8x2x16xf32>
    %26 = vector.shape_cast %25 : vector<8x2x16xf32> to vector<8x32xf32>
    %27 = arith.truncf %26 : vector<8x32xf32> to vector<8x32xbf16>
    %c0_6 = arith.constant 0 : index
    %c0_7 = arith.constant 0 : index
    %c0_8 = arith.constant 0 : index
    %28 = vector.load %arg2[%c0_6, %c0_7, %c0_8] : memref<1x8x32xbf16, #tpu.memory_space<vmem>>, vector<1x8x32xbf16>
    %29 = vector.shape_cast %28 : vector<1x8x32xbf16> to vector<8x32xbf16>
    %30 = vector.shape_cast %27 : vector<8x32xbf16> to vector<1x8x32xbf16>
    tpu.vector_store %arg2[%c0_6, %c0_7, %c0_8], %30 {strides = array<i32>} : memref<1x8x32xbf16, #tpu.memory_space<vmem>>, vector<1x8x32xbf16>,
    return
  }
  func.func @transform_0(%arg0: i32) -> (i32, i32, i32) {
    %c0_i32 = arith.constant 0 : i32
    %c0_i32_0 = arith.constant 0 : i32
    %c0_i32_1 = arith.constant 0 : i32
    return %arg0, %c0_i32, %c0_i32_0 : i32, i32, i32
  }
  func.func @transform_1(%arg0: i32) -> (i32, i32, i32) {
    %c0_i32 = arith.constant 0 : i32
    %c0_i32_0 = arith.constant 0 : i32
    %c0_i32_1 = arith.constant 0 : i32
    return %arg0, %c0_i32, %c0_i32_0 : i32, i32, i32
  }
}

module attributes {stable_mosaic.version = 11 : i64} {
  func.func @kernel(%arg0: i32, %arg1: i32, %arg2: memref<16x32xbf16, #tpu.memory_space<vmem>>, %arg3: memref<32x32xbf16, #tpu.memory_space<vmem>>, %arg4: memref<1x32xf32, #tpu.memory_space<vmem>>, %arg5: memref<16x32xbf16, #tpu.memory_space<vmem>>, %arg6: memref<16x32xbf16, #tpu.memory_space<vmem>>) attributes {dimension_semantics = [#tpu.dimension_semantics<parallel>, #tpu.dimension_semantics<parallel>], iteration_bounds = array<i64: 1, 1>, scalar_prefetch = 0 : i64, scratch_operands = 0 : i64, tpu.core_type = #tpu.core_type<tc>, window_params = [{transform_indices = @transform_0, window_bounds = array<i64: 16, 32>}, {transform_indices = @transform_1, window_bounds = array<i64: 32, 32>}, {transform_indices = @transform_2, window_bounds = array<i64: 1, 32>}, {transform_indices = @transform_3, window_bounds = array<i64: 16, 32>}, {transform_indices = @transform_4, window_bounds = array<i64: 16, 32>}]} {
    %c0 = arith.constant 0 : index
    %c0_0 = arith.constant 0 : index
    %0 = vector.load %arg2[%c0, %c0_0] : memref<16x32xbf16, #tpu.memory_space<vmem>>, vector<16x32xbf16>
    %c0_1 = arith.constant 0 : index
    %c0_2 = arith.constant 0 : index
    %1 = vector.load %arg3[%c0_1, %c0_2] : memref<32x32xbf16, #tpu.memory_space<vmem>>, vector<32x32xbf16>
    %cst = arith.constant dense<0.000000e+00> : vector<16x32xf32>
    %2 = tpu.matmul %0, %1, %cst {dimension_numbers = #tpu.dot_dimension_numbers<[1], [0], [0], [1], [0, 0, 1, 1], [], []>} : vector<16x32xbf16>, vector<32x32xbf16>, vector<16x32xf32> -> vector<16x32xf32>
    %c0_3 = arith.constant 0 : index
    %c0_4 = arith.constant 0 : index
    %3 = vector.load %arg4[%c0_3, %c0_4] : memref<1x32xf32, #tpu.memory_space<vmem>>, vector<1x32xf32>
    %4 = vector.broadcast %3 : vector<1x32xf32> to vector<16x32xf32>
    %5 = arith.addf %2, %4 : vector<16x32xf32>
    %c0_5 = arith.constant 0 : index
    %c0_6 = arith.constant 0 : index
    %6 = vector.load %arg5[%c0_5, %c0_6] : memref<16x32xbf16, #tpu.memory_space<vmem>>, vector<16x32xbf16>
    %7 = arith.extf %6 : vector<16x32xbf16> to vector<16x32xf32>
    %8 = arith.addf %5, %7 : vector<16x32xf32>
    %9 = arith.truncf %8 : vector<16x32xf32> to vector<16x32xbf16>
    %c0_7 = arith.constant 0 : index
    %c0_8 = arith.constant 0 : index
    %10 = vector.load %arg6[%c0_7, %c0_8] : memref<16x32xbf16, #tpu.memory_space<vmem>>, vector<16x32xbf16>
    tpu.vector_store %arg6[%c0_7, %c0_8], %9 {strides = array<i32>} : memref<16x32xbf16, #tpu.memory_space<vmem>>, vector<16x32xbf16>,
    return
  }
  func.func @transform_0(%arg0: i32, %arg1: i32) -> (i32, i32) {
    %c0_i32 = arith.constant 0 : i32
    %c0_i32_0 = arith.constant 0 : i32
    return %arg0, %c0_i32 : i32, i32
  }
  func.func @transform_1(%arg0: i32, %arg1: i32) -> (i32, i32) {
    %c0_i32 = arith.constant 0 : i32
    %c0_i32_0 = arith.constant 0 : i32
    return %c0_i32, %arg1 : i32, i32
  }
  func.func @transform_2(%arg0: i32, %arg1: i32) -> (i32, i32) {
    %c0_i32 = arith.constant 0 : i32
    %c0_i32_0 = arith.constant 0 : i32
    return %c0_i32, %arg1 : i32, i32
  }
  func.func @transform_3(%arg0: i32, %arg1: i32) -> (i32, i32) {
    %c0_i32 = arith.constant 0 : i32
    return %arg0, %arg1 : i32, i32
  }
  func.func @transform_4(%arg0: i32, %arg1: i32) -> (i32, i32) {
    %c0_i32 = arith.constant 0 : i32
    return %arg0, %arg1 : i32, i32
  }
}

module attributes {stable_mosaic.version = 11 : i64} {
  func.func @kernel(%arg0: i32, %arg1: i32, %arg2: memref<16x32xbf16, #tpu.memory_space<vmem>>, %arg3: memref<32x128xbf16, #tpu.memory_space<vmem>>, %arg4: memref<1x32xf32, #tpu.memory_space<vmem>>, %arg5: memref<1x32xf32, #tpu.memory_space<vmem>>, %arg6: memref<1x128xf32, #tpu.memory_space<vmem>>, %arg7: memref<16x128xbf16, #tpu.memory_space<vmem>>, %arg8: memref<16x32xbf16, #tpu.memory_space<vmem>>) attributes {dimension_semantics = [#tpu.dimension_semantics<parallel>, #tpu.dimension_semantics<arbitrary>], iteration_bounds = array<i64: 1, 1>, scalar_prefetch = 0 : i64, scratch_operands = 1 : i64, tpu.core_type = #tpu.core_type<tc>, window_params = [{transform_indices = @transform_0, window_bounds = array<i64: 16, 32>}, {transform_indices = @transform_1, window_bounds = array<i64: 32, 128>}, {pipeline_mode = #tpu.pipeline_mode<synchronous>, transform_indices = @transform_2, window_bounds = array<i64: 1, 32>}, {pipeline_mode = #tpu.pipeline_mode<synchronous>, transform_indices = @transform_3, window_bounds = array<i64: 1, 32>}, {transform_indices = @transform_4, window_bounds = array<i64: 1, 128>}, {transform_indices = @transform_5, window_bounds = array<i64: 16, 128>}]} {
    %c0_i32 = arith.constant 0 : i32
    %0 = arith.cmpi eq, %arg1, %c0_i32 : i32
    %1 = arith.extui %0 : i1 to i32
    %c0_i32_0 = arith.constant 0 : i32
    %2 = arith.cmpi ne, %1, %c0_i32_0 : i32
    scf.if %2 {
      %c0_12 = arith.constant 0 : index
      %c0_13 = arith.constant 0 : index
      %24 = vector.load %arg2[%c0_12, %c0_13] : memref<16x32xbf16, #tpu.memory_space<vmem>>, vector<16x32xbf16>
      %25 = arith.extf %24 : vector<16x32xbf16> to vector<16x32xf32>
      %cst_14 = arith.constant dense<0.000000e+00> : vector<16xf32>
      %26 = vector.multi_reduction <add>, %25, %cst_14 [1] : vector<16x32xf32> to vector<16xf32>
      %27 = vector.shape_cast %26 : vector<16xf32> to vector<16x1xf32>
      %cst_15 = arith.constant 3.200000e+01 : f32
      %28 = vector.broadcast %cst_15 : f32 to vector<16x1xf32>
      %29 = arith.divf %27, %28 : vector<16x1xf32>
      %30 = vector.broadcast %29 : vector<16x1xf32> to vector<16x32xf32>
      %31 = arith.subf %25, %30 : vector<16x32xf32>
      %32 = arith.mulf %31, %31 : vector<16x32xf32>
      %cst_16 = arith.constant dense<0.000000e+00> : vector<16xf32>
      %33 = vector.multi_reduction <add>, %32, %cst_16 [1] : vector<16x32xf32> to vector<16xf32>
      %34 = vector.shape_cast %33 : vector<16xf32> to vector<16x1xf32>
      %cst_17 = arith.constant 3.200000e+01 : f32
      %35 = vector.broadcast %cst_17 : f32 to vector<16x1xf32>
      %36 = arith.divf %34, %35 : vector<16x1xf32>
      %37 = vector.broadcast %29 : vector<16x1xf32> to vector<16x32xf32>
      %38 = arith.subf %25, %37 : vector<16x32xf32>
      %cst_18 = arith.constant 9.99999974E-6 : f32
      %39 = vector.broadcast %cst_18 : f32 to vector<16x1xf32>
      %40 = arith.addf %36, %39 : vector<16x1xf32>
      %41 = math.rsqrt %40 : vector<16x1xf32>
      %42 = vector.broadcast %41 : vector<16x1xf32> to vector<16x32xf32>
      %43 = arith.mulf %38, %42 : vector<16x32xf32>
      %c0_19 = arith.constant 0 : index
      %c0_20 = arith.constant 0 : index
      %44 = vector.load %arg4[%c0_19, %c0_20] : memref<1x32xf32, #tpu.memory_space<vmem>>, vector<1x32xf32>
      %45 = vector.broadcast %44 : vector<1x32xf32> to vector<16x32xf32>
      %46 = arith.mulf %43, %45 : vector<16x32xf32>
      %c0_21 = arith.constant 0 : index
      %c0_22 = arith.constant 0 : index
      %47 = vector.load %arg5[%c0_21, %c0_22] : memref<1x32xf32, #tpu.memory_space<vmem>>, vector<1x32xf32>
      %48 = vector.broadcast %47 : vector<1x32xf32> to vector<16x32xf32>
      %49 = arith.addf %46, %48 : vector<16x32xf32>
      %50 = arith.truncf %49 : vector<16x32xf32> to vector<16x32xbf16>
      %c0_23 = arith.constant 0 : index
      %c0_24 = arith.constant 0 : index
      %51 = vector.load %arg8[%c0_23, %c0_24] : memref<16x32xbf16, #tpu.memory_space<vmem>>, vector<16x32xbf16>
      tpu.vector_store %arg8[%c0_23, %c0_24], %50 {strides = array<i32>} : memref<16x32xbf16, #tpu.memory_space<vmem>>, vector<16x32xbf16>,
    } else {
    }
    %c0 = arith.constant 0 : index
    %c0_1 = arith.constant 0 : index
    %3 = vector.load %arg8[%c0, %c0_1] : memref<16x32xbf16, #tpu.memory_space<vmem>>, vector<16x32xbf16>
    %c0_2 = arith.constant 0 : index
    %c0_3 = arith.constant 0 : index
    %4 = vector.load %arg3[%c0_2, %c0_3] : memref<32x128xbf16, #tpu.memory_space<vmem>>, vector<32x128xbf16>
    %cst = arith.constant dense<0.000000e+00> : vector<16x128xf32>
    %5 = tpu.matmul %3, %4, %cst {dimension_numbers = #tpu.dot_dimension_numbers<[1], [0], [0], [1], [0, 0, 1, 1], [], []>} : vector<16x32xbf16>, vector<32x128xbf16>, vector<16x128xf32> -> vector<16x128xf32>
    %c0_4 = arith.constant 0 : index
    %c0_5 = arith.constant 0 : index
    %6 = vector.load %arg6[%c0_4, %c0_5] : memref<1x128xf32, #tpu.memory_space<vmem>>, vector<1x128xf32>
    %7 = vector.broadcast %6 : vector<1x128xf32> to vector<16x128xf32>
    %8 = arith.addf %5, %7 : vector<16x128xf32>
    %cst_6 = arith.constant 5.000000e-01 : f32
    %9 = vector.broadcast %cst_6 : f32 to vector<16x128xf32>
    %10 = arith.mulf %9, %8 : vector<16x128xf32>
    %cst_7 = arith.constant 4.471500e-02 : f32
    %11 = vector.broadcast %cst_7 : f32 to vector<16x128xf32>
    %12 = arith.mulf %11, %8 : vector<16x128xf32>
    %13 = arith.mulf %12, %8 : vector<16x128xf32>
    %14 = arith.mulf %13, %8 : vector<16x128xf32>
    %15 = arith.addf %8, %14 : vector<16x128xf32>
    %cst_8 = arith.constant 0.797884583 : f32
    %16 = vector.broadcast %cst_8 : f32 to vector<16x128xf32>
    %17 = arith.mulf %16, %15 : vector<16x128xf32>
    %18 = math.tanh %17 : vector<16x128xf32>
    %cst_9 = arith.constant 1.000000e+00 : f32
    %19 = vector.broadcast %cst_9 : f32 to vector<16x128xf32>
    %20 = arith.addf %19, %18 : vector<16x128xf32>
    %21 = arith.mulf %10, %20 : vector<16x128xf32>
    %22 = arith.truncf %21 : vector<16x128xf32> to vector<16x128xbf16>
    %c0_10 = arith.constant 0 : index
    %c0_11 = arith.constant 0 : index
    %23 = vector.load %arg7[%c0_10, %c0_11] : memref<16x128xbf16, #tpu.memory_space<vmem>>, vector<16x128xbf16>
    tpu.vector_store %arg7[%c0_10, %c0_11], %22 {strides = array<i32>} : memref<16x128xbf16, #tpu.memory_space<vmem>>, vector<16x128xbf16>,
    return
  }
  func.func @transform_0(%arg0: i32, %arg1: i32) -> (i32, i32) {
    %c0_i32 = arith.constant 0 : i32
    %c0_i32_0 = arith.constant 0 : i32
    return %arg0, %c0_i32 : i32, i32
  }
  func.func @transform_1(%arg0: i32, %arg1: i32) -> (i32, i32) {
    %c0_i32 = arith.constant 0 : i32
    %c0_i32_0 = arith.constant 0 : i32
    return %c0_i32, %arg1 : i32, i32
  }
  func.func @transform_2(%arg0: i32, %arg1: i32) -> (i32, i32) {
    %c0_i32 = arith.constant 0 : i32
    %c0_i32_0 = arith.constant 0 : i32
    %c0_i32_1 = arith.constant 0 : i32
    return %c0_i32, %c0_i32_0 : i32, i32
  }
  func.func @transform_3(%arg0: i32, %arg1: i32) -> (i32, i32) {
    %c0_i32 = arith.constant 0 : i32
    %c0_i32_0 = arith.constant 0 : i32
    %c0_i32_1 = arith.constant 0 : i32
    return %c0_i32, %c0_i32_0 : i32, i32
  }
  func.func @transform_4(%arg0: i32, %arg1: i32) -> (i32, i32) {
    %c0_i32 = arith.constant 0 : i32
    %c0_i32_0 = arith.constant 0 : i32
    return %c0_i32, %arg1 : i32, i32
  }
  func.func @transform_5(%arg0: i32, %arg1: i32) -> (i32, i32) {
    %c0_i32 = arith.constant 0 : i32
    return %arg0, %arg1 : i32, i32
  }
}

module attributes {stable_mosaic.version = 11 : i64} {
  func.func @kernel(%arg0: i32, %arg1: i32, %arg2: memref<16x128xbf16, #tpu.memory_space<vmem>>, %arg3: memref<128x32xbf16, #tpu.memory_space<vmem>>, %arg4: memref<1x32xf32, #tpu.memory_space<vmem>>, %arg5: memref<16x32xbf16, #tpu.memory_space<vmem>>, %arg6: memref<16x32xbf16, #tpu.memory_space<vmem>>) attributes {dimension_semantics = [#tpu.dimension_semantics<parallel>, #tpu.dimension_semantics<parallel>], iteration_bounds = array<i64: 1, 1>, scalar_prefetch = 0 : i64, scratch_operands = 0 : i64, tpu.core_type = #tpu.core_type<tc>, window_params = [{transform_indices = @transform_0, window_bounds = array<i64: 16, 128>}, {transform_indices = @transform_1, window_bounds = array<i64: 128, 32>}, {transform_indices = @transform_2, window_bounds = array<i64: 1, 32>}, {transform_indices = @transform_3, window_bounds = array<i64: 16, 32>}, {transform_indices = @transform_4, window_bounds = array<i64: 16, 32>}]} {
    %c0 = arith.constant 0 : index
    %c0_0 = arith.constant 0 : index
    %0 = vector.load %arg2[%c0, %c0_0] : memref<16x128xbf16, #tpu.memory_space<vmem>>, vector<16x128xbf16>
    %c0_1 = arith.constant 0 : index
    %c0_2 = arith.constant 0 : index
    %1 = vector.load %arg3[%c0_1, %c0_2] : memref<128x32xbf16, #tpu.memory_space<vmem>>, vector<128x32xbf16>
    %cst = arith.constant dense<0.000000e+00> : vector<16x32xf32>
    %2 = tpu.matmul %0, %1, %cst {dimension_numbers = #tpu.dot_dimension_numbers<[1], [0], [0], [1], [0, 0, 1, 1], [], []>} : vector<16x128xbf16>, vector<128x32xbf16>, vector<16x32xf32> -> vector<16x32xf32>
    %c0_3 = arith.constant 0 : index
    %c0_4 = arith.constant 0 : index
    %3 = vector.load %arg4[%c0_3, %c0_4] : memref<1x32xf32, #tpu.memory_space<vmem>>, vector<1x32xf32>
    %4 = vector.broadcast %3 : vector<1x32xf32> to vector<16x32xf32>
    %5 = arith.addf %2, %4 : vector<16x32xf32>
    %c0_5 = arith.constant 0 : index
    %c0_6 = arith.constant 0 : index
    %6 = vector.load %arg5[%c0_5, %c0_6] : memref<16x32xbf16, #tpu.memory_space<vmem>>, vector<16x32xbf16>
    %7 = arith.extf %6 : vector<16x32xbf16> to vector<16x32xf32>
    %8 = arith.addf %5, %7 : vector<16x32xf32>
    %9 = arith.truncf %8 : vector<16x32xf32> to vector<16x32xbf16>
    %c0_7 = arith.constant 0 : index
    %c0_8 = arith.constant 0 : index
    %10 = vector.load %arg6[%c0_7, %c0_8] : memref<16x32xbf16, #tpu.memory_space<vmem>>, vector<16x32xbf16>
    tpu.vector_store %arg6[%c0_7, %c0_8], %9 {strides = array<i32>} : memref<16x32xbf16, #tpu.memory_space<vmem>>, vector<16x32xbf16>,
    return
  }
  func.func @transform_0(%arg0: i32, %arg1: i32) -> (i32, i32) {
    %c0_i32 = arith.constant 0 : i32
    %c0_i32_0 = arith.constant 0 : i32
    return %arg0, %c0_i32 : i32, i32
  }
  func.func @transform_1(%arg0: i32, %arg1: i32) -> (i32, i32) {
    %c0_i32 = arith.constant 0 : i32
    %c0_i32_0 = arith.constant 0 : i32
    return %c0_i32, %arg1 : i32, i32
  }
  func.func @transform_2(%arg0: i32, %arg1: i32) -> (i32, i32) {
    %c0_i32 = arith.constant 0 : i32
    %c0_i32_0 = arith.constant 0 : i32
    return %c0_i32, %arg1 : i32, i32
  }
  func.func @transform_3(%arg0: i32, %arg1: i32) -> (i32, i32) {
    %c0_i32 = arith.constant 0 : i32
    return %arg0, %arg1 : i32, i32
  }
  func.func @transform_4(%arg0: i32, %arg1: i32) -> (i32, i32) {
    %c0_i32 = arith.constant 0 : i32
    return %arg0, %arg1 : i32, i32
  }
}

module attributes {stable_mosaic.version = 11 : i64} {
  func.func @kernel(%arg0: i32, %arg1: i32, %arg2: memref<16x32xbf16, #tpu.memory_space<vmem>>, %arg3: memref<32x128xbf16, #tpu.memory_space<vmem>>, %arg4: memref<1x32xf32, #tpu.memory_space<vmem>>, %arg5: memref<1x32xf32, #tpu.memory_space<vmem>>, %arg6: memref<16x128xf32, #tpu.memory_space<vmem>>, %arg7: memref<16x32xbf16, #tpu.memory_space<vmem>>) attributes {dimension_semantics = [#tpu.dimension_semantics<parallel>, #tpu.dimension_semantics<arbitrary>], iteration_bounds = array<i64: 1, 1>, scalar_prefetch = 0 : i64, scratch_operands = 1 : i64, tpu.core_type = #tpu.core_type<tc>, window_params = [{transform_indices = @transform_0, window_bounds = array<i64: 16, 32>}, {transform_indices = @transform_1, window_bounds = array<i64: 32, 128>}, {pipeline_mode = #tpu.pipeline_mode<synchronous>, transform_indices = @transform_2, window_bounds = array<i64: 1, 32>}, {pipeline_mode = #tpu.pipeline_mode<synchronous>, transform_indices = @transform_3, window_bounds = array<i64: 1, 32>}, {transform_indices = @transform_4, window_bounds = array<i64: 16, 128>}]} {
    %c0_i32 = arith.constant 0 : i32
    %0 = arith.cmpi eq, %arg1, %c0_i32 : i32
    %1 = arith.extui %0 : i1 to i32
    %c0_i32_0 = arith.constant 0 : i32
    %2 = arith.cmpi ne, %1, %c0_i32_0 : i32
    scf.if %2 {
      %c0_6 = arith.constant 0 : index
      %c0_7 = arith.constant 0 : index
      %7 = vector.load %arg2[%c0_6, %c0_7] : memref<16x32xbf16, #tpu.memory_space<vmem>>, vector<16x32xbf16>
      %8 = arith.extf %7 : vector<16x32xbf16> to vector<16x32xf32>
      %cst_8 = arith.constant dense<0.000000e+00> : vector<16xf32>
      %9 = vector.multi_reduction <add>, %8, %cst_8 [1] : vector<16x32xf32> to vector<16xf32>
      %10 = vector.shape_cast %9 : vector<16xf32> to vector<16x1xf32>
      %cst_9 = arith.constant 3.200000e+01 : f32
      %11 = vector.broadcast %cst_9 : f32 to vector<16x1xf32>
      %12 = arith.divf %10, %11 : vector<16x1xf32>
      %13 = vector.broadcast %12 : vector<16x1xf32> to vector<16x32xf32>
      %14 = arith.subf %8, %13 : vector<16x32xf32>
      %15 = arith.mulf %14, %14 : vector<16x32xf32>
      %cst_10 = arith.constant dense<0.000000e+00> : vector<16xf32>
      %16 = vector.multi_reduction <add>, %15, %cst_10 [1] : vector<16x32xf32> to vector<16xf32>
      %17 = vector.shape_cast %16 : vector<16xf32> to vector<16x1xf32>
      %cst_11 = arith.constant 3.200000e+01 : f32
      %18 = vector.broadcast %cst_11 : f32 to vector<16x1xf32>
      %19 = arith.divf %17, %18 : vector<16x1xf32>
      %20 = vector.broadcast %12 : vector<16x1xf32> to vector<16x32xf32>
      %21 = arith.subf %8, %20 : vector<16x32xf32>
      %cst_12 = arith.constant 9.99999974E-6 : f32
      %22 = vector.broadcast %cst_12 : f32 to vector<16x1xf32>
      %23 = arith.addf %19, %22 : vector<16x1xf32>
      %24 = math.rsqrt %23 : vector<16x1xf32>
      %25 = vector.broadcast %24 : vector<16x1xf32> to vector<16x32xf32>
      %26 = arith.mulf %21, %25 : vector<16x32xf32>
      %c0_13 = arith.constant 0 : index
      %c0_14 = arith.constant 0 : index
      %27 = vector.load %arg4[%c0_13, %c0_14] : memref<1x32xf32, #tpu.memory_space<vmem>>, vector<1x32xf32>
      %28 = vector.broadcast %27 : vector<1x32xf32> to vector<16x32xf32>
      %29 = arith.mulf %26, %28 : vector<16x32xf32>
      %c0_15 = arith.constant 0 : index
      %c0_16 = arith.constant 0 : index
      %30 = vector.load %arg5[%c0_15, %c0_16] : memref<1x32xf32, #tpu.memory_space<vmem>>, vector<1x32xf32>
      %31 = vector.broadcast %30 : vector<1x32xf32> to vector<16x32xf32>
      %32 = arith.addf %29, %31 : vector<16x32xf32>
      %33 = arith.truncf %32 : vector<16x32xf32> to vector<16x32xbf16>
      %c0_17 = arith.constant 0 : index
      %c0_18 = arith.constant 0 : index
      %34 = vector.load %arg7[%c0_17, %c0_18] : memref<16x32xbf16, #tpu.memory_space<vmem>>, vector<16x32xbf16>
      tpu.vector_store %arg7[%c0_17, %c0_18], %33 {strides = array<i32>} : memref<16x32xbf16, #tpu.memory_space<vmem>>, vector<16x32xbf16>,
    } else {
    }
    %c0 = arith.constant 0 : index
    %c0_1 = arith.constant 0 : index
    %3 = vector.load %arg7[%c0, %c0_1] : memref<16x32xbf16, #tpu.memory_space<vmem>>, vector<16x32xbf16>
    %c0_2 = arith.constant 0 : index
    %c0_3 = arith.constant 0 : index
    %4 = vector.load %arg3[%c0_2, %c0_3] : memref<32x128xbf16, #tpu.memory_space<vmem>>, vector<32x128xbf16>
    %cst = arith.constant dense<0.000000e+00> : vector<16x128xf32>
    %5 = tpu.matmul %3, %4, %cst {dimension_numbers = #tpu.dot_dimension_numbers<[1], [0], [0], [1], [0, 0, 1, 1], [], []>} : vector<16x32xbf16>, vector<32x128xbf16>, vector<16x128xf32> -> vector<16x128xf32>
    %c0_4 = arith.constant 0 : index
    %c0_5 = arith.constant 0 : index
    %6 = vector.load %arg6[%c0_4, %c0_5] : memref<16x128xf32, #tpu.memory_space<vmem>>, vector<16x128xf32>
    tpu.vector_store %arg6[%c0_4, %c0_5], %5 {strides = array<i32>} : memref<16x128xf32, #tpu.memory_space<vmem>>, vector<16x128xf32>,
    return
  }
  func.func @transform_0(%arg0: i32, %arg1: i32) -> (i32, i32) {
    %c0_i32 = arith.constant 0 : i32
    %c0_i32_0 = arith.constant 0 : i32
    return %arg0, %c0_i32 : i32, i32
  }
  func.func @transform_1(%arg0: i32, %arg1: i32) -> (i32, i32) {
    %c0_i32 = arith.constant 0 : i32
    %c0_i32_0 = arith.constant 0 : i32
    return %c0_i32, %arg1 : i32, i32
  }
  func.func @transform_2(%arg0: i32, %arg1: i32) -> (i32, i32) {
    %c0_i32 = arith.constant 0 : i32
    %c0_i32_0 = arith.constant 0 : i32
    %c0_i32_1 = arith.constant 0 : i32
    return %c0_i32, %c0_i32_0 : i32, i32
  }
  func.func @transform_3(%arg0: i32, %arg1: i32) -> (i32, i32) {
    %c0_i32 = arith.constant 0 : i32
    %c0_i32_0 = arith.constant 0 : i32
    %c0_i32_1 = arith.constant 0 : i32
    return %c0_i32, %c0_i32_0 : i32, i32
  }
  func.func @transform_4(%arg0: i32, %arg1: i32) -> (i32, i32) {
    %c0_i32 = arith.constant 0 : i32
    return %arg0, %arg1 : i32, i32
  }
}

</mosaic_0001>

<llo_original>
// kernel: _lambda_.11
$region0: #{_lambda_.11}
  #allocation0 [shape = 'u32[]', space=smem, size = 0x4, offset = 0x4, fixed_abs, tag = 'smem constant byte address 0x4 - core index']
  #allocation1 [shape = 'u32[144,128]{1,0:T(1,128)}', space=vmem, size = 0x12000, scoped, tag = 'internal scratch']
  #allocation2 [shape = 'bf16[16,32]{1,0:T(16,128)(2,1)}', space=vmem, size = 0x1000, scoped, tag = 'scratch operand']
  %s0 = inlined_call_operand.vmem [shape: bf16[16,32], index: 0, kind: input, shape index: {}]
  %s1 = inlined_call_operand.vmem [shape: bf16[32,96], index: 1, kind: input, shape index: {}]
  %s2 = inlined_call_operand.vmem [shape: f32[1,32], index: 2, kind: input, shape index: {}]
  %s3 = inlined_call_operand.vmem [shape: f32[1,32], index: 3, kind: input, shape index: {}]
  %s4 = inlined_call_operand.vmem [shape: f32[1,96], index: 4, kind: input, shape index: {}]
  %s5 = inlined_call_operand.vmem [shape: bf16[16,96], index: 5, kind: output, shape index: {}]
  %s6 = sld [smem:[#allocation0]]
  $region34: #{_lambda_.11} parent=0
    _
  %s8 = ssub.s32 1, %s6
  %s9 = scalar_select 0, %s8, %s6
  // Predicated region
  $region2: #{_lambda_.11} parent=0 // pred_check
    _
  $region3: #{_lambda_.11} parent=0 // pred_check_branch
    %11 = sbr.rel (0) target = $region5
  $region4: #{_lambda_.11} parent=0 // pred_region
    _
  $region5: #{_lambda_.11} parent=0 // pred_fallthru
    _
  // Predicated region
  $region6: #{_lambda_.11} parent=0 // pred_check
    _
  $region7: #{_lambda_.11} parent=0 // pred_check_branch
    %13 = sbr.rel (0) target = $region9
  $region8: #{_lambda_.11} parent=0 // pred_region
    _
  $region9: #{_lambda_.11} parent=0 // pred_fallthru
    _
  // Predicated region
  $region10: #{_lambda_.11} parent=0 // pred_check
    _
  $region11: #{_lambda_.11} parent=0 // pred_check_branch
    %15 = sbr.rel (0) target = $region13
  $region12: #{_lambda_.11} parent=0 // pred_region
    _
  $region13: #{_lambda_.11} parent=0 // pred_fallthru
    _
  // Predicated region
  $region14: #{_lambda_.11} parent=0 // pred_check
    _
  $region15: #{_lambda_.11} parent=0 // pred_check_branch
    %17 = sbr.rel (0) target = $region17
  $region16: #{_lambda_.11} parent=0 // pred_region
    _
  $region17: #{_lambda_.11} parent=0 // pred_fallthru
    _
  // Predicated region
  $region18: #{_lambda_.11} parent=0 // pred_check
    _
  $region19: #{_lambda_.11} parent=0 // pred_check_branch
    %19 = sbr.rel (0) target = $region21
  $region20: #{_lambda_.11} parent=0 // pred_region
    _
  $region21: #{_lambda_.11} parent=0 // pred_fallthru
    _
  %p21 = scmp.eq.s32.totalorder 0, 0
  // Predicated region
  $region22: #{_lambda_.11} parent=0 // pred_check
    %p22 = pneg %p21
  $region23: #{_lambda_.11} parent=0 // pred_check_branch
    %24 = sbr.rel (%p22) target = $region25
  $region24: #{_lambda_.11} parent=0 // pred_region
    %v25 = vld [vmem:[%s0] sm:$0xf]
    %v26 = vld [vmem:[%s0 + $0x4] sm:$0xf]
    %v27 = vunpack.c.l.bf16 %v25
    %v28 = vunpack.c.l.bf16 %v26
    %vm29 = vcmask 261120
    %v30 = vsel %vm29, %v27, 0.0
    %31 = vadd.xlane.f32.xlu0 %v30
    %v32 = vpop.xlane.xlu0 %31
    %v33 = vsel %vm29, %v28, 0.0
    %34 = vadd.xlane.f32.xlu0 %v33
    %v35 = vpop.xlane.xlu0 %34
    %v36 = vrcp.pop 32.0
    %v37 = vmul.f32 %v32, %v36
    %v38 = vmul.f32 %v35, %v36
    %v39 = vsub.f32 %v27, %v37
    %v40 = vsub.f32 %v28, %v38
    %v41 = vmul.f32 %v39, %v39
    %v42 = vmul.f32 %v40, %v40
    %v43 = vsel %vm29, %v41, 0.0
    %44 = vadd.xlane.f32.xlu0 %v43
    %v45 = vpop.xlane.xlu0 %44
    %v46 = vsel %vm29, %v42, 0.0
    %47 = vadd.xlane.f32.xlu0 %v46
    %v48 = vpop.xlane.xlu0 %47
    %v49 = vmul.f32 %v45, %v36
    %v50 = vmul.f32 %v48, %v36
    %v51 = vadd.f32 %v49, 1e-05
    %v52 = vadd.f32 %v50, 1e-05
    %v53 = vrsqrt.pop %v51
    %v54 = vrsqrt.pop %v52
    %v55 = vmul.f32 %v39, %v53
    %v56 = vmul.f32 %v40, %v54
    %v57 = vld [vmem:[%s2] sm:$0x1]
    %v59 = vlaneseq
    %v60 = vshrl.u32 %v59, 7
    %v61 = vsub.s32 0, %v60
    %v62 = vrot.slane %v57, %v61
    %v64 = vmul.f32 %v55, %v62
    %v65 = vmul.f32 %v56, %v62
    %v66 = vld [vmem:[%s3] sm:$0x1]
    %v68 = vlaneseq
    %v69 = vshrl.u32 %v68, 7
    %v70 = vsub.s32 0, %v69
    %v71 = vrot.slane %v66, %v70
    %v73 = vadd.f32 %v64, %v71
    %v74 = vadd.f32 %v65, %v71
    %v75 = vpack.c.bf16 %v74, %v73
    %76 = vst.msk [vmem:[#allocation2] sm:$0xff] %vm29, %v75
  $region25: #{_lambda_.11} parent=0 // pred_fallthru
    _
  %v77 = vld [vmem:[#allocation2] sm:$0xff]
  %v78 = vld [vmem:[%s1] sm:$0xf]
  %v79 = vld [vmem:[%s1 + $0x4] sm:$0xf]
  %v80 = vld [vmem:[%s1 + $0x8] sm:$0xf]
  %v81 = vld [vmem:[%s1 + $0xc] sm:$0xf]
  %v82 = vld [vmem:[%s4] sm:$0x1]
  %v84 = vlaneseq
  %v85 = vshrl.u32 %v84, 7
  %v86 = vsub.s32 0, %v85
  %v87 = vrot.slane %v82, %v86
  %v93 = vunpack.c.l.b16 %v78
  %v94 = vunpack.c.l.b16 %v79
  %v95 = vunpack.c.l.b16 %v80
  %v96 = vunpack.c.l.b16 %v81
  %v97 = vpack.c.b16 %v94, %v93
  %v98 = vpack.c.b16 %v96, %v95
  %vm101 = vcmask 261120
  %v103 = vsel %vm101, %v77, 0
  %105 = vmatprep.subr.bf16.mxu0 0
  %106 = vmatpush1.bf16.msra.mxu0 %v97
  %107 = vmatprep.subr.bf16.mxu0 0
  %108 = vmatpush1.bf16.msra.mxu0 %v98
  %109 = vmatprep.subr.bf16.mxu0 0
  %110 = vmatpush1.bf16.msra.mxu0 0
  %111 = vmatprep.subr.bf16.mxu0 0
  %112 = vmatpush1.bf16.msra.mxu0 0
  %113 = vmatprep.subr.bf16.mxu0 0
  %114 = vmatpush1.bf16.msra.mxu0 0
  %115 = vmatprep.subr.bf16.mxu0 0
  %116 = vmatpush1.bf16.msra.mxu0 0
  %117 = vmatprep.subr.bf16.mxu0 0
  %118 = vmatpush1.bf16.msra.mxu0 0
  %119 = vmatprep.subr.bf16.mxu0 0
  %120 = vmatpush1.bf16.msra.mxu0 0
  %121 = vmatprep.subr.bf16.mxu0 0
  %122 = vmatpush1.bf16.msra.mxu0 0
  %123 = vmatprep.subr.bf16.mxu0 0
  %124 = vmatpush1.bf16.msra.mxu0 0
  %125 = vmatprep.subr.bf16.mxu0 0
  %126 = vmatpush1.bf16.msra.mxu0 0
  %127 = vmatprep.subr.bf16.mxu0 0
  %128 = vmatpush1.bf16.msra.mxu0 0
  %129 = vmatprep.subr.bf16.mxu0 0
  %130 = vmatpush1.bf16.msra.mxu0 0
  %131 = vmatprep.subr.bf16.mxu0 0
  %132 = vmatpush1.bf16.msra.mxu0 0
  %133 = vmatprep.subr.bf16.mxu0 0
  %134 = vmatpush1.bf16.msra.mxu0 0
  %135 = vmatprep.subr.bf16.mxu0 0
  %136 = vmatpush1.bf16.msra.mxu0 0
  %137 = vmatprep.mubr.bf16.mxu0 0
  %138 = vmatmul.mubr.bf16.gmra.mrb[0].mxu0 %v103
  %v139 = vpop.f32.mrb[0].mxu0
  %v140 = vadd.f32 %v87, %v139
  %v141 = vpop.f32.mrb[0].mxu0
  %v142 = vpop.f32.mrb[0].mxu0
  %v143 = vadd.f32 %v87, %v142
  %v144 = vpop.f32.mrb[0].mxu0
  %145 = vdwg.mxu0
  %v146 = vpack.c.bf16 %v143, %v140
  %v148 = vunpack.c.l.b16 %v146
  %v149 = vunpack.c.h.b16 %v146
  %v150 = vpack.c.b16 %v148, %v148
  %v151 = vpack.c.b16 %v149, %v149
  %vm154 = vcmask 781312
  %155 = vst.msk [vmem:[%s5] sm:$0xf] %vm154, %v150
  %156 = vst.msk [vmem:[%s5 + $0x4] sm:$0xf] %vm154, %v151
  // Predicated region
  $region26: #{_lambda_.11} parent=0 // pred_check
    _
  $region27: #{_lambda_.11} parent=0 // pred_check_branch
    %158 = sbr.rel (0) target = $region29
  $region28: #{_lambda_.11} parent=0 // pred_region
    _
  $region29: #{_lambda_.11} parent=0 // pred_fallthru
    _
  // Predicated region
  $region30: #{_lambda_.11} parent=0 // pred_check
    _
  $region31: #{_lambda_.11} parent=0 // pred_check_branch
    %160 = sbr.rel (0) target = $region33
  $region32: #{_lambda_.11} parent=0 // pred_region
    _
  $region33: #{_lambda_.11} parent=0 // pred_fallthru
    _

// kernel: _lambda_.13
$region0: #{_lambda_.13}
  #allocation0 [shape = 'u32[]', space=smem, size = 0x4, offset = 0x4, fixed_abs, tag = 'smem constant byte address 0x4 - core index']
  #allocation1 [shape = 'u32[144,128]{1,0:T(1,128)}', space=vmem, size = 0x12000, scoped, tag = 'internal scratch']
  %s0 = inlined_call_operand.vmem [shape: bf16[16,32], index: 0, kind: input, shape index: {}]
  %s1 = inlined_call_operand.vmem [shape: bf16[32,32], index: 1, kind: input, shape index: {}]
  %s2 = inlined_call_operand.vmem [shape: f32[1,32], index: 2, kind: input, shape index: {}]
  %s3 = inlined_call_operand.vmem [shape: bf16[16,32], index: 3, kind: input, shape index: {}]
  %s4 = inlined_call_operand.vmem [shape: bf16[16,32], index: 4, kind: output, shape index: {}]
  %s5 = sld [smem:[#allocation0]]
  $region26: #{_lambda_.13} parent=0
    _
  %s7 = ssub.s32 1, %s5
  %s8 = scalar_select 0, %s7, %s5
  // Predicated region
  $region2: #{_lambda_.13} parent=0 // pred_check
    _
  $region3: #{_lambda_.13} parent=0 // pred_check_branch
    %10 = sbr.rel (0) target = $region5
  $region4: #{_lambda_.13} parent=0 // pred_region
    _
  $region5: #{_lambda_.13} parent=0 // pred_fallthru
    _
  // Predicated region
  $region6: #{_lambda_.13} parent=0 // pred_check
    _
  $region7: #{_lambda_.13} parent=0 // pred_check_branch
    %12 = sbr.rel (0) target = $region9
  $region8: #{_lambda_.13} parent=0 // pred_region
    _
  $region9: #{_lambda_.13} parent=0 // pred_fallthru
    _
  // Predicated region
  $region10: #{_lambda_.13} parent=0 // pred_check
    _
  $region11: #{_lambda_.13} parent=0 // pred_check_branch
    %14 = sbr.rel (0) target = $region13
  $region12: #{_lambda_.13} parent=0 // pred_region
    _
  $region13: #{_lambda_.13} parent=0 // pred_fallthru
    _
  // Predicated region
  $region14: #{_lambda_.13} parent=0 // pred_check
    _
  $region15: #{_lambda_.13} parent=0 // pred_check_branch
    %16 = sbr.rel (0) target = $region17
  $region16: #{_lambda_.13} parent=0 // pred_region
    _
  $region17: #{_lambda_.13} parent=0 // pred_fallthru
    _
  %v18 = vld [vmem:[%s0] sm:$0xf]
  %v19 = vld [vmem:[%s0 + $0x4] sm:$0xf]
  %v20 = vld [vmem:[%s1] sm:$0xf]
  %v21 = vld [vmem:[%s1 + $0x4] sm:$0xf]
  %v22 = vld [vmem:[%s1 + $0x8] sm:$0xf]
  %v23 = vld [vmem:[%s1 + $0xc] sm:$0xf]
  %v24 = vld [vmem:[%s2] sm:$0x1]
  %v26 = vlaneseq
  %v27 = vshrl.u32 %v26, 7
  %v28 = vsub.s32 0, %v27
  %v29 = vrot.slane %v24, %v28
  %v33 = vunpack.c.l.b16 %v18
  %v34 = vunpack.c.l.b16 %v19
  %v35 = vpack.c.b16 %v34, %v33
  %v40 = vunpack.c.l.b16 %v20
  %v41 = vunpack.c.l.b16 %v21
  %v42 = vunpack.c.l.b16 %v22
  %v43 = vunpack.c.l.b16 %v23
  %v44 = vpack.c.b16 %v41, %v40
  %v45 = vpack.c.b16 %v43, %v42
  %vm48 = vcmask 261120
  %v50 = vsel %vm48, %v35, 0
  %52 = vmatprep.subr.bf16.mxu0 0
  %53 = vmatpush1.bf16.msra.mxu0 %v44
  %54 = vmatprep.subr.bf16.mxu0 0
  %55 = vmatpush1.bf16.msra.mxu0 %v45
  %56 = vmatprep.subr.bf16.mxu0 0
  %57 = vmatpush1.bf16.msra.mxu0 0
  %58 = vmatprep.subr.bf16.mxu0 0
  %59 = vmatpush1.bf16.msra.mxu0 0
  %60 = vmatprep.subr.bf16.mxu0 0
  %61 = vmatpush1.bf16.msra.mxu0 0
  %62 = vmatprep.subr.bf16.mxu0 0
  %63 = vmatpush1.bf16.msra.mxu0 0
  %64 = vmatprep.subr.bf16.mxu0 0
  %65 = vmatpush1.bf16.msra.mxu0 0
  %66 = vmatprep.subr.bf16.mxu0 0
  %67 = vmatpush1.bf16.msra.mxu0 0
  %68 = vmatprep.subr.bf16.mxu0 0
  %69 = vmatpush1.bf16.msra.mxu0 0
  %70 = vmatprep.subr.bf16.mxu0 0
  %71 = vmatpush1.bf16.msra.mxu0 0
  %72 = vmatprep.subr.bf16.mxu0 0
  %73 = vmatpush1.bf16.msra.mxu0 0
  %74 = vmatprep.subr.bf16.mxu0 0
  %75 = vmatpush1.bf16.msra.mxu0 0
  %76 = vmatprep.subr.bf16.mxu0 0
  %77 = vmatpush1.bf16.msra.mxu0 0
  %78 = vmatprep.subr.bf16.mxu0 0
  %79 = vmatpush1.bf16.msra.mxu0 0
  %80 = vmatprep.subr.bf16.mxu0 0
  %81 = vmatpush1.bf16.msra.mxu0 0
  %82 = vmatprep.subr.bf16.mxu0 0
  %83 = vmatpush1.bf16.msra.mxu0 0
  %84 = vmatprep.mubr.bf16.mxu0 0
  %85 = vmatmul.mubr.bf16.gmra.mrb[0].mxu0 %v50
  %v86 = vpop.f32.mrb[0].mxu0
  %v87 = vadd.f32 %v29, %v86
  %v88 = vpop.f32.mrb[0].mxu0
  %v89 = vpop.f32.mrb[0].mxu0
  %v90 = vadd.f32 %v29, %v89
  %v91 = vpop.f32.mrb[0].mxu0
  %92 = vdwg.mxu0
  %v93 = vld [vmem:[%s3] sm:$0xf]
  %v94 = vld [vmem:[%s3 + $0x4] sm:$0xf]
  %v95 = vunpack.c.l.bf16 %v93
  %v96 = vunpack.c.l.bf16 %v94
  %v97 = vadd.f32 %v87, %v95
  %v98 = vadd.f32 %v90, %v96
  %v99 = vpack.c.bf16 %v98, %v97
  %v101 = vunpack.c.l.b16 %v99
  %v102 = vunpack.c.h.b16 %v99
  %v103 = vpack.c.b16 %v101, %v101
  %v104 = vpack.c.b16 %v102, %v102
  %vm107 = vcmask 257024
  %108 = vst.msk [vmem:[%s4] sm:$0xf] %vm107, %v103
  %109 = vst.msk [vmem:[%s4 + $0x4] sm:$0xf] %vm107, %v104
  // Predicated region
  $region18: #{_lambda_.13} parent=0 // pred_check
    _
  $region19: #{_lambda_.13} parent=0 // pred_check_branch
    %111 = sbr.rel (0) target = $region21
  $region20: #{_lambda_.13} parent=0 // pred_region
    _
  $region21: #{_lambda_.13} parent=0 // pred_fallthru
    _
  // Predicated region
  $region22: #{_lambda_.13} parent=0 // pred_check
    _
  $region23: #{_lambda_.13} parent=0 // pred_check_branch
    %113 = sbr.rel (0) target = $region25
  $region24: #{_lambda_.13} parent=0 // pred_region
    _
  $region25: #{_lambda_.13} parent=0 // pred_fallthru
    _

// kernel: _lambda_.12
$region0: #{_lambda_.12}
  #allocation0 [shape = 'u32[]', space=smem, size = 0x4, offset = 0x4, fixed_abs, tag = 'smem constant byte address 0x4 - core index']
  #allocation1 [shape = 'u32[144,128]{1,0:T(1,128)}', space=vmem, size = 0x12000, scoped, tag = 'internal scratch']
  %s0 = inlined_call_operand.vmem [shape: bf16[2,8,96], index: 0, kind: input, shape index: {}]
  %s1 = inlined_call_operand.vmem [shape: bf16[2,8,32], index: 1, kind: output, shape index: {}]
  %s2 = sld [smem:[#allocation0]]
  $region37: #{_lambda_.12} parent=0
    _
  %s4 = ssub.s32 1, %s2
  %s5 = scalar_select 0, %s4, %s2
  loop: start=0, step=1, limit=4
  $region2: #{_lambda_.12} parent=0 // loop_pre_header
    _
  $region3: #{_lambda_.12} parent=0 // loop_header
    %s7 = sphi 0, %s11
    %p8 = scmp.ge.s32.totalorder %s7, 4
    %s17 = sphi 0, %s19
    %s20 = sphi 0, %s17
    %s21 = sphi 0, %s20
    %s37 = sphi 0, %s21
    %s43 = sphi 0, %s45
    %s46 = sphi 0, %s43
    %s47 = sphi 0, %s46
    %s63 = sphi 0, %s47
  $region4: #{_lambda_.12} parent=0 // loop_header_branch
    %10 = sbr.rel (%p8) target = $region8
  $region5: #{_lambda_.12} parent=0 // loop_body
    %s12 = ssub.s32 %s7, 1
    %s13 = ssub.s32 %s7, 2
    %s14 = sadd.s32 %s7, 1
    %s15 = ssub.s32 %s7, %s14
    %p16 = scmp.eq.s32.totalorder %s15, 0
    %s18 = sadd.s32 %s17, 1
    %s19 = scalar_select %p16, %s17, %s18
    %p22 = pneg %p16
    %p23 = scmp.eq.s32.totalorder %s7, 1
    %p24 = por %p22, %p23
    %p25 = scmp.ne.s32.totalorder %s17, %s20
    %p26 = scmp.eq.s32.totalorder %s7, 0
    %p27 = por %p25, %p26
    %p28 = scmp.ne.s32.totalorder %s17, %s20
    %p29 = scmp.eq.s32.totalorder %s12, 1
    %p30 = por %p28, %p29
    %p31 = scmp.ne.s32.totalorder %s20, %s21
    %p32 = scmp.eq.s32.totalorder %s12, 0
    %p33 = por %p31, %p32
    %p34 = scmp.ne.s32.totalorder %s20, %s21
    %p35 = scmp.eq.s32.totalorder %s13, 1
    %p36 = por %p34, %p35
    %p38 = scmp.ne.s32.totalorder %s21, %s37
    %p39 = scmp.eq.s32.totalorder %s13, 0
    %p40 = por %p38, %p39
    %s41 = ssub.s32 %s7, %s14
    %p42 = scmp.eq.s32.totalorder %s41, 0
    %s44 = sadd.s32 %s43, 1
    %s45 = scalar_select %p42, %s43, %s44
    %p48 = pneg %p42
    %p49 = scmp.eq.s32.totalorder %s7, 1
    %p50 = por %p48, %p49
    %p51 = scmp.ne.s32.totalorder %s43, %s46
    %p52 = scmp.eq.s32.totalorder %s7, 0
    %p53 = por %p51, %p52
    %p54 = scmp.ne.s32.totalorder %s43, %s46
    %p55 = scmp.eq.s32.totalorder %s12, 1
    %p56 = por %p54, %p55
    %p57 = scmp.ne.s32.totalorder %s46, %s47
    %p58 = scmp.eq.s32.totalorder %s12, 0
    %p59 = por %p57, %p58
    %p60 = scmp.ne.s32.totalorder %s46, %s47
    %p61 = scmp.eq.s32.totalorder %s13, 1
    %p62 = por %p60, %p61
    %p64 = scmp.ne.s32.totalorder %s47, %s63
    %p65 = scmp.eq.s32.totalorder %s13, 0
    %p66 = por %p64, %p65
    %p67 = scmp.le.s32.totalorder 1, %s7
    %p68 = scmp.lt.s32.totalorder %s7, 3
    %p69 = pnand %p67, %p68
    %p70 = pneg %p69
    // Predicated region
    $region9: #{_lambda_.12} parent=5 // pred_check
      _
    $region10: #{_lambda_.12} parent=5 // pred_check_branch
      %72 = sbr.rel (%p69) target = $region12
    $region11: #{_lambda_.12} parent=5 // pred_region
      %s73 = ssub.s32 %s7, 1
    $region12: #{_lambda_.12} parent=5 // pred_fallthru
      _
    %p74 = scmp.lt.s32.totalorder %s7, 2
    // Predicated region
    $region13: #{_lambda_.12} parent=5 // pred_check
      %p75 = pneg %p74
    $region14: #{_lambda_.12} parent=5 // pred_check_branch
      %77 = sbr.rel (%p75) target = $region16
    $region15: #{_lambda_.12} parent=5 // pred_region
      // Predicated region
      $region17: #{_lambda_.12} parent=15 // pred_check
        %p78 = pneg %p27
      $region18: #{_lambda_.12} parent=15 // pred_check_branch
        %80 = sbr.rel (%p78) target = $region20
      $region19: #{_lambda_.12} parent=15 // pred_region
        %p81 = scmp.lt.s32.totalorder %s7, 1
        %s82 = scalar_select %p81, %s7, 1
        %s83 = smul.addr %s82, 4
        %s84 = scalar_lea.vmem %s0, %s83
      $region20: #{_lambda_.12} parent=15 // pred_fallthru
        _
    $region16: #{_lambda_.12} parent=5 // pred_fallthru
      _
    %p85 = scmp.le.s32.totalorder 1, %s7
    %p86 = scmp.lt.s32.totalorder %s7, 3
    %p87 = pnand %p85, %p86
    %p88 = pneg %p87
    // Predicated region
    $region21: #{_lambda_.12} parent=5 // pred_check
      _
    $region22: #{_lambda_.12} parent=5 // pred_check_branch
      %90 = sbr.rel (%p87) target = $region24
    $region23: #{_lambda_.12} parent=5 // pred_region
      %s91 = ssub.s32 %s7, 1
      %p92 = scmp.lt.s32.totalorder %s12, 1
      %s93 = scalar_select %p92, %s12, 1
      %s94 = smul.addr %s93, 4
      %s95 = scalar_lea.vmem %s0, %s94
      %p96 = pneg %p33
      %p97 = pneg %p30
      %p98 = pneg %p59
      %p99 = pneg %p56
      %p100 = scmp.lt.s32.totalorder %s12, 1
      %s101 = scalar_select %p100, %s12, 1
      %s102 = smul.addr %s101, 4
      %s103 = scalar_lea.vmem %s1, %s102
      %p104 = scmp.lt.s32.totalorder %s12, 1
      %s105 = scalar_select %p104, %s12, 1
      %s106 = smul.addr %s105, 4
      %s107 = scalar_lea.vmem %s0, %s106
      %p108 = scmp.lt.s32.totalorder %s12, 1
      %s109 = scalar_select %p108, %s12, 1
      %s110 = smul.addr %s109, 4
      %s111 = scalar_lea.vmem %s1, %s110
      %v113 = vld [vmem:[%s107] sm:$0xf]
      %v114 = vunpack.c.l.bf16 %v113
      %v115 = vmul.f32 %v114, 0.25
      %v116 = vpack.c.bf16 %v115, %v115
      %118 = vrot.lane.b32.xlu0 %v116, 112
      %v119 = vpop.permute.xlu0 %118
      %121 = vrot.lane.b32.xlu0 %v113, 112
      %v122 = vpop.permute.xlu0 %121
      %v123 = vunpack.c.l.b16 %v113
      %v124 = vunpack.c.l.b16 %v122
      %v125 = vpack.c.b16 %v123, %v123
      %v126 = vpack.c.b16 %v124, %v124
      %127 = vrot.lane.b32.xlu0 %v125, 96
      %v128 = vpop.permute.xlu0 %127
      %129 = vrot.lane.b32.xlu0 %v126, 96
      %v130 = vpop.permute.xlu0 %129
      %133 = vxpose.xlu0.c.b16.start [1/8] %v128, 128
      %134 = vxpose.xlu0.c.b16.cont [2/8] 0, 128
      %135 = vxpose.xlu0.c.b16.cont [3/8] 0, 128
      %136 = vxpose.xlu0.c.b16.cont [4/8] 0, 128
      %137 = vxpose.xlu0.c.b16.cont [5/8] 0, 128
      %138 = vxpose.xlu0.c.b16.cont [6/8] 0, 128
      %139 = vxpose.xlu0.c.b16.cont [7/8] 0, 128
      %140 = vxpose.xlu0.c.b16.end [8/8] 0, 128
      %v141 = vpop.trf.xlu0
      %v142 = vpop.trf.xlu0
      %v143 = vpop.trf.xlu0
      %v144 = vpop.trf.xlu0
      %v145 = vpop.trf.xlu0
      %v146 = vpop.trf.xlu0
      %v147 = vpop.trf.xlu0
      %v148 = vpop.trf.xlu0
      %149 = vxpose.xlu0.c.b16.start [1/8] %v130, 128
      %150 = vxpose.xlu0.c.b16.cont [2/8] 0, 128
      %151 = vxpose.xlu0.c.b16.cont [3/8] 0, 128
      %152 = vxpose.xlu0.c.b16.cont [4/8] 0, 128
      %153 = vxpose.xlu0.c.b16.cont [5/8] 0, 128
      %154 = vxpose.xlu0.c.b16.cont [6/8] 0, 128
      %155 = vxpose.xlu0.c.b16.cont [7/8] 0, 128
      %156 = vxpose.xlu0.c.b16.end [8/8] 0, 128
      %v157 = vpop.trf.xlu0
      %v158 = vpop.trf.xlu0
      %v159 = vpop.trf.xlu0
      %v160 = vpop.trf.xlu0
      %v161 = vpop.trf.xlu0
      %v162 = vpop.trf.xlu0
      %v163 = vpop.trf.xlu0
      %v164 = vpop.trf.xlu0
      %vm165 = vcmask 130048
      %v167 = vsel %vm165, %v116, 0
      %169 = vmatprep.subr.bf16.mxu0 0
      %170 = vmatpush1.bf16.msra.mxu0 %v141
      %171 = vmatprep.subr.bf16.mxu0 0
      %172 = vmatpush1.bf16.msra.mxu0 0
      %173 = vmatprep.subr.bf16.mxu0 0
      %174 = vmatpush1.bf16.msra.mxu0 0
      %175 = vmatprep.subr.bf16.mxu0 0
      %176 = vmatpush1.bf16.msra.mxu0 0
      %177 = vmatprep.subr.bf16.mxu0 0
      %178 = vmatpush1.bf16.msra.mxu0 0
      %179 = vmatprep.subr.bf16.mxu0 0
      %180 = vmatpush1.bf16.msra.mxu0 0
      %181 = vmatprep.subr.bf16.mxu0 0
      %182 = vmatpush1.bf16.msra.mxu0 0
      %183 = vmatprep.subr.bf16.mxu0 0
      %184 = vmatpush1.bf16.msra.mxu0 0
      %185 = vmatprep.subr.bf16.mxu0 0
      %186 = vmatpush1.bf16.msra.mxu0 0
      %187 = vmatprep.subr.bf16.mxu0 0
      %188 = vmatpush1.bf16.msra.mxu0 0
      %189 = vmatprep.subr.bf16.mxu0 0
      %190 = vmatpush1.bf16.msra.mxu0 0
      %191 = vmatprep.subr.bf16.mxu0 0
      %192 = vmatpush1.bf16.msra.mxu0 0
      %193 = vmatprep.subr.bf16.mxu0 0
      %194 = vmatpush1.bf16.msra.mxu0 0
      %195 = vmatprep.subr.bf16.mxu0 0
      %196 = vmatpush1.bf16.msra.mxu0 0
      %197 = vmatprep.subr.bf16.mxu0 0
      %198 = vmatpush1.bf16.msra.mxu0 0
      %199 = vmatprep.subr.bf16.mxu0 0
      %200 = vmatpush1.bf16.msra.mxu0 0
      %201 = vmatprep.mubr.bf16.mxu0 0
      %202 = vmatmul.mubr.bf16.gmra.mrb[0].mxu0 %v167
      %v203 = vpop.f32.mrb[0].mxu0
      %v204 = vadd.f32 0.0, %v203
      %v205 = vpop.f32.mrb[0].mxu0
      %v206 = vpop.f32.mrb[0].mxu0
      %v207 = vpop.f32.mrb[0].mxu0
      %208 = vdwg.mxu0
      %v210 = vsel %vm165, %v119, 0
      %212 = vmatprep.subr.bf16.mxu0 0
      %213 = vmatpush1.bf16.msra.mxu0 %v157
      %214 = vmatprep.subr.bf16.mxu0 0
      %215 = vmatpush1.bf16.msra.mxu0 0
      %216 = vmatprep.subr.bf16.mxu0 0
      %217 = vmatpush1.bf16.msra.mxu0 0
      %218 = vmatprep.subr.bf16.mxu0 0
      %219 = vmatpush1.bf16.msra.mxu0 0
      %220 = vmatprep.subr.bf16.mxu0 0
      %221 = vmatpush1.bf16.msra.mxu0 0
      %222 = vmatprep.subr.bf16.mxu0 0
      %223 = vmatpush1.bf16.msra.mxu0 0
      %224 = vmatprep.subr.bf16.mxu0 0
      %225 = vmatpush1.bf16.msra.mxu0 0
      %226 = vmatprep.subr.bf16.mxu0 0
      %227 = vmatpush1.bf16.msra.mxu0 0
      %228 = vmatprep.subr.bf16.mxu0 0
      %229 = vmatpush1.bf16.msra.mxu0 0
      %230 = vmatprep.subr.bf16.mxu0 0
      %231 = vmatpush1.bf16.msra.mxu0 0
      %232 = vmatprep.subr.bf16.mxu0 0
      %233 = vmatpush1.bf16.msra.mxu0 0
      %234 = vmatprep.subr.bf16.mxu0 0
      %235 = vmatpush1.bf16.msra.mxu0 0
      %236 = vmatprep.subr.bf16.mxu0 0
      %237 = vmatpush1.bf16.msra.mxu0 0
      %238 = vmatprep.subr.bf16.mxu0 0
      %239 = vmatpush1.bf16.msra.mxu0 0
      %240 = vmatprep.subr.bf16.mxu0 0
      %241 = vmatpush1.bf16.msra.mxu0 0
      %242 = vmatprep.subr.bf16.mxu0 0
      %243 = vmatpush1.bf16.msra.mxu0 0
      %244 = vmatprep.mubr.bf16.mxu0 0
      %245 = vmatmul.mubr.bf16.gmra.mrb[0].mxu0 %v210
      %v246 = vpop.f32.mrb[0].mxu0
      %v247 = vadd.f32 0.0, %v246
      %v248 = vpop.f32.mrb[0].mxu0
      %v249 = vpop.f32.mrb[0].mxu0
      %v250 = vpop.f32.mrb[0].mxu0
      %251 = vdwg.mxu0
      %vm252 = vcmask 64512
      %v253 = vsel %vm252, %v204, -inf
      %254 = vmax.xlane.f32.xlu0 %v253
      %v255 = vpop.xlane.xlu0 %254
      %v256 = vsel %vm252, %v247, -inf
      %257 = vmax.xlane.f32.xlu0 %v256
      %v258 = vpop.xlane.xlu0 %257
      %v259 = vsub.f32 %v204, %v255
      %v260 = vsub.f32 %v247, %v258
      %v261 = vmul.f32 %v259, 1.442695
      %v262 = vpow.pop %v261
      %v263 = vmul.f32 %v260, 1.442695
      %v264 = vpow.pop %v263
      %v265 = vsel %vm252, %v262, 0.0
      %266 = vadd.xlane.f32.xlu0 %v265
      %v267 = vpop.xlane.xlu0 %266
      %v268 = vsel %vm252, %v264, 0.0
      %269 = vadd.xlane.f32.xlu0 %v268
      %v270 = vpop.xlane.xlu0 %269
      %v271 = vrcp.pop %v267
      %v272 = vrcp.pop %v270
      %v273 = vmul.f32 %v262, %v271
      %v274 = vmul.f32 %v264, %v272
      %v275 = vpack.c.bf16 %v273, %v273
      %v276 = vpack.c.bf16 %v274, %v274
      %277 = vrot.lane.b32.xlu0 %v125, 64
      %v278 = vpop.permute.xlu0 %277
      %v280 = vsel %vm252, %v275, 0
      %vm282 = vcmask 1043456
      %v284 = vsel %vm282, %v278, 0
      %286 = vmatprep.subr.bf16.mxu0 0
      %287 = vmatpush1.bf16.msra.mxu0 %v284
      %288 = vmatprep.subr.bf16.mxu0 0
      %289 = vmatpush1.bf16.msra.mxu0 0
      %290 = vmatprep.subr.bf16.mxu0 0
      %291 = vmatpush1.bf16.msra.mxu0 0
      %292 = vmatprep.subr.bf16.mxu0 0
      %293 = vmatpush1.bf16.msra.mxu0 0
      %294 = vmatprep.subr.bf16.mxu0 0
      %295 = vmatpush1.bf16.msra.mxu0 0
      %296 = vmatprep.subr.bf16.mxu0 0
      %297 = vmatpush1.bf16.msra.mxu0 0
      %298 = vmatprep.subr.bf16.mxu0 0
      %299 = vmatpush1.bf16.msra.mxu0 0
      %300 = vmatprep.subr.bf16.mxu0 0
      %301 = vmatpush1.bf16.msra.mxu0 0
      %302 = vmatprep.subr.bf16.mxu0 0
      %303 = vmatpush1.bf16.msra.mxu0 0
      %304 = vmatprep.subr.bf16.mxu0 0
      %305 = vmatpush1.bf16.msra.mxu0 0
      %306 = vmatprep.subr.bf16.mxu0 0
      %307 = vmatpush1.bf16.msra.mxu0 0
      %308 = vmatprep.subr.bf16.mxu0 0
      %309 = vmatpush1.bf16.msra.mxu0 0
      %310 = vmatprep.subr.bf16.mxu0 0
      %311 = vmatpush1.bf16.msra.mxu0 0
      %312 = vmatprep.subr.bf16.mxu0 0
      %313 = vmatpush1.bf16.msra.mxu0 0
      %314 = vmatprep.subr.bf16.mxu0 0
      %315 = vmatpush1.bf16.msra.mxu0 0
      %316 = vmatprep.subr.bf16.mxu0 0
      %317 = vmatpush1.bf16.msra.mxu0 0
      %318 = vmatprep.mubr.bf16.mxu0 0
      %319 = vmatmul.mubr.bf16.gmra.mrb[0].mxu0 %v280
      %v320 = vpop.f32.mrb[0].mxu0
      %v321 = vadd.f32 0.0, %v320
      %v322 = vpop.f32.mrb[0].mxu0
      %v323 = vpop.f32.mrb[0].mxu0
      %v324 = vpop.f32.mrb[0].mxu0
      %325 = vdwg.mxu0
      %326 = vrot.lane.b32.xlu0 %v126, 64
      %v327 = vpop.permute.xlu0 %326
      %v329 = vsel %vm252, %v276, 0
      %v332 = vsel %vm282, %v327, 0
      %334 = vmatprep.subr.bf16.mxu0 0
      %335 = vmatpush1.bf16.msra.mxu0 %v332
      %336 = vmatprep.subr.bf16.mxu0 0
      %337 = vmatpush1.bf16.msra.mxu0 0
      %338 = vmatprep.subr.bf16.mxu0 0
      %339 = vmatpush1.bf16.msra.mxu0 0
      %340 = vmatprep.subr.bf16.mxu0 0
      %341 = vmatpush1.bf16.msra.mxu0 0
      %342 = vmatprep.subr.bf16.mxu0 0
      %343 = vmatpush1.bf16.msra.mxu0 0
      %344 = vmatprep.subr.bf16.mxu0 0
      %345 = vmatpush1.bf16.msra.mxu0 0
      %346 = vmatprep.subr.bf16.mxu0 0
      %347 = vmatpush1.bf16.msra.mxu0 0
      %348 = vmatprep.subr.bf16.mxu0 0
      %349 = vmatpush1.bf16.msra.mxu0 0
      %350 = vmatprep.subr.bf16.mxu0 0
      %351 = vmatpush1.bf16.msra.mxu0 0
      %352 = vmatprep.subr.bf16.mxu0 0
      %353 = vmatpush1.bf16.msra.mxu0 0
      %354 = vmatprep.subr.bf16.mxu0 0
      %355 = vmatpush1.bf16.msra.mxu0 0
      %356 = vmatprep.subr.bf16.mxu0 0
      %357 = vmatpush1.bf16.msra.mxu0 0
      %358 = vmatprep.subr.bf16.mxu0 0
      %359 = vmatpush1.bf16.msra.mxu0 0
      %360 = vmatprep.subr.bf16.mxu0 0
      %361 = vmatpush1.bf16.msra.mxu0 0
      %362 = vmatprep.subr.bf16.mxu0 0
      %363 = vmatpush1.bf16.msra.mxu0 0
      %364 = vmatprep.subr.bf16.mxu0 0
      %365 = vmatpush1.bf16.msra.mxu0 0
      %366 = vmatprep.mubr.bf16.mxu0 0
      %367 = vmatmul.mubr.bf16.gmra.mrb[0].mxu0 %v329
      %v368 = vpop.f32.mrb[0].mxu0
      %v369 = vadd.f32 0.0, %v368
      %v370 = vpop.f32.mrb[0].mxu0
      %v371 = vpop.f32.mrb[0].mxu0
      %v372 = vpop.f32.mrb[0].mxu0
      %373 = vdwg.mxu0
      %v374 = vcombine.high %v321, 0.0
      %v376 = vunpack.c.l.s4 1983009808
      %v377 = vunpack.c.0.s8 %v376
      %v378 = vlaneseq
      %v379 = vshrl.u32 %v378, 7
      %v380 = vsub.s32 %v377, %v379
      %v381 = vrot.slane %v321, %v380
      %v383 = vunpack.c.l.s4 1983009808
      %v384 = vunpack.c.0.s8 %v383
      %v385 = vlaneseq
      %v386 = vshrl.u32 %v385, 7
      %v387 = vsub.s32 %v384, %v386
      %v388 = vrot.slane %v374, %v387
      %v389 = vcombine.high %v369, 0.0
      %v391 = vunpack.c.l.s4 1983009808
      %v392 = vunpack.c.0.s8 %v391
      %v393 = vlaneseq
      %v394 = vshrl.u32 %v393, 7
      %v395 = vsub.s32 %v392, %v394
      %v396 = vrot.slane %v369, %v395
      %v398 = vunpack.c.l.s4 1983009808
      %v399 = vunpack.c.0.s8 %v398
      %v400 = vlaneseq
      %v401 = vshrl.u32 %v400, 7
      %v402 = vsub.s32 %v399, %v401
      %v403 = vrot.slane %v389, %v402
      %v404 = vcombine.low %v381, %v396
      %v405 = vcombine.high %v381, %v396
      %v407 = vunpack.c.l.s4 1934713408
      %v408 = vunpack.c.0.s8 %v407
      %v409 = vlaneseq
      %v410 = vshrl.u32 %v409, 7
      %v411 = vsub.s32 %v408, %v410
      %v412 = vrot.slane %v404, %v411
      %v414 = vunpack.c.l.s4 1934713408
      %v415 = vunpack.c.0.s8 %v414
      %v416 = vlaneseq
      %v417 = vshrl.u32 %v416, 7
      %v418 = vsub.s32 %v415, %v417
      %v419 = vrot.slane %v405, %v418
      %v420 = vcombine.low %v388, %v403
      %v421 = vcombine.high %v388, %v403
      %v423 = vunpack.c.l.s4 1934713408
      %v424 = vunpack.c.0.s8 %v423
      %v425 = vlaneseq
      %v426 = vshrl.u32 %v425, 7
      %v427 = vsub.s32 %v424, %v426
      %v428 = vrot.slane %v420, %v427
      %v430 = vunpack.c.l.s4 1934713408
      %v431 = vunpack.c.0.s8 %v430
      %v432 = vlaneseq
      %v433 = vshrl.u32 %v432, 7
      %v434 = vsub.s32 %v431, %v433
      %v435 = vrot.slane %v421, %v434
      %v436 = vcombine.high %v412, 0.0
      %v437 = vcombine.high %v419, 0.0
      %v438 = vcombine.high %v428, 0.0
      %v439 = vcombine.high %v435, 0.0
      %v440 = vcombine.low %v412, %v419
      %v442 = vunpack.c.l.s4 1983009808
      %v443 = vunpack.c.0.s8 %v442
      %v444 = vlaneseq
      %v445 = vshrl.u32 %v444, 7
      %v446 = vsub.s32 %v443, %v445
      %v447 = vrot.slane %v440, %v446
      %v448 = vcombine.low %v436, %v437
      %v450 = vunpack.c.l.s4 1983009808
      %v451 = vunpack.c.0.s8 %v450
      %v452 = vlaneseq
      %v453 = vshrl.u32 %v452, 7
      %v454 = vsub.s32 %v451, %v453
      %v455 = vrot.slane %v448, %v454
      %v456 = vcombine.low %v428, %v435
      %v458 = vunpack.c.l.s4 1983009808
      %v459 = vunpack.c.0.s8 %v458
      %v460 = vlaneseq
      %v461 = vshrl.u32 %v460, 7
      %v462 = vsub.s32 %v459, %v461
      %v463 = vrot.slane %v456, %v462
      %v464 = vcombine.low %v438, %v439
      %v466 = vunpack.c.l.s4 1983009808
      %v467 = vunpack.c.0.s8 %v466
      %v468 = vlaneseq
      %v469 = vshrl.u32 %v468, 7
      %v470 = vsub.s32 %v467, %v469
      %v471 = vrot.slane %v464, %v470
      %v472 = vcombine.low %v447, %v455
      %v474 = vunpack.c.l.s4 1934713408
      %v475 = vunpack.c.0.s8 %v474
      %v476 = vlaneseq
      %v477 = vshrl.u32 %v476, 7
      %v478 = vsub.s32 %v475, %v477
      %v479 = vrot.slane %v472, %v478
      %v480 = vcombine.low %v463, %v471
      %v482 = vunpack.c.l.s4 1934713408
      %v483 = vunpack.c.0.s8 %v482
      %v484 = vlaneseq
      %v485 = vshrl.u32 %v484, 7
      %v486 = vsub.s32 %v483, %v485
      %v487 = vrot.slane %v480, %v486
      %v488 = vcombine.low %v479, %v487
      %v489 = vcombine.high %v479, %v487
      %491 = vrot.lane.b32.xlu0 %v489, 16
      %v492 = vpop.permute.xlu0 %491
      %v494 = vsel %vm165, %v488, %v492
      %v495 = vpack.c.bf16 %v494, %v494
      %vm496 = vcmask 257024
      %497 = vst.msk [vmem:[%s111] sm:$0xf] %vm496, %v495
      %p498 = scmp.lt.s32.totalorder %s12, 1
      %s499 = scalar_select %p498, %s12, 1
      %s500 = smul.addr %s499, 4
      %s501 = scalar_lea.vmem %s1, %s500
      // Predicated region
      $region25: #{_lambda_.12} parent=23 // pred_check
        %p502 = pneg %p56
      $region26: #{_lambda_.12} parent=23 // pred_check_branch
        %504 = sbr.rel (%p502) target = $region28
      $region27: #{_lambda_.12} parent=23 // pred_region
        _
      $region28: #{_lambda_.12} parent=23 // pred_fallthru
        _
    $region24: #{_lambda_.12} parent=5 // pred_fallthru
      _
    %p505 = scmp.le.s32.totalorder 2, %s7
    // Predicated region
    $region29: #{_lambda_.12} parent=5 // pred_check
      %p506 = pneg %p505
    $region30: #{_lambda_.12} parent=5 // pred_check_branch
      %508 = sbr.rel (%p506) target = $region32
    $region31: #{_lambda_.12} parent=5 // pred_region
      %s509 = ssub.s32 %s7, 2
      // Predicated region
      $region33: #{_lambda_.12} parent=31 // pred_check
        %p510 = pneg %p62
      $region34: #{_lambda_.12} parent=31 // pred_check_branch
        %512 = sbr.rel (%p510) target = $region36
      $region35: #{_lambda_.12} parent=31 // pred_region
        %p513 = scmp.lt.s32.totalorder %s13, 1
        %s514 = scalar_select %p513, %s13, 1
        %s515 = smul.addr %s514, 4
        %s516 = scalar_lea.vmem %s1, %s515
      $region36: #{_lambda_.12} parent=31 // pred_fallthru
        _
    $region32: #{_lambda_.12} parent=5 // pred_fallthru
      _
  $region6: #{_lambda_.12} parent=0 // loop_footer
    %s11 = sadd.s32 1, %s7
  $region7: #{_lambda_.12} parent=0 // loop_footer_branch
    %6 = sbr.rel target = $region3
  $region8: #{_lambda_.12} parent=0 // loop_exit
    _

// kernel: _lambda_.14
$region0: #{_lambda_.14}
  #allocation0 [shape = 'u32[]', space=smem, size = 0x4, offset = 0x4, fixed_abs, tag = 'smem constant byte address 0x4 - core index']
  #allocation1 [shape = 'u32[144,128]{1,0:T(1,128)}', space=vmem, size = 0x12000, scoped, tag = 'internal scratch']
  #allocation2 [shape = 'bf16[16,32]{1,0:T(16,128)(2,1)}', space=vmem, size = 0x1000, scoped, tag = 'scratch operand']
  %s0 = inlined_call_operand.vmem [shape: bf16[16,32], index: 0, kind: input, shape index: {}]
  %s1 = inlined_call_operand.vmem [shape: bf16[32,128], index: 1, kind: input, shape index: {}]
  %s2 = inlined_call_operand.vmem [shape: f32[1,32], index: 2, kind: input, shape index: {}]
  %s3 = inlined_call_operand.vmem [shape: f32[1,32], index: 3, kind: input, shape index: {}]
  %s4 = inlined_call_operand.vmem [shape: f32[1,128], index: 4, kind: input, shape index: {}]
  %s5 = inlined_call_operand.vmem [shape: bf16[16,128], index: 5, kind: output, shape index: {}]
  %s6 = sld [smem:[#allocation0]]
  $region34: #{_lambda_.14} parent=0
    _
  %s8 = ssub.s32 1, %s6
  %s9 = scalar_select 0, %s8, %s6
  // Predicated region
  $region2: #{_lambda_.14} parent=0 // pred_check
    _
  $region3: #{_lambda_.14} parent=0 // pred_check_branch
    %11 = sbr.rel (0) target = $region5
  $region4: #{_lambda_.14} parent=0 // pred_region
    _
  $region5: #{_lambda_.14} parent=0 // pred_fallthru
    _
  // Predicated region
  $region6: #{_lambda_.14} parent=0 // pred_check
    _
  $region7: #{_lambda_.14} parent=0 // pred_check_branch
    %13 = sbr.rel (0) target = $region9
  $region8: #{_lambda_.14} parent=0 // pred_region
    _
  $region9: #{_lambda_.14} parent=0 // pred_fallthru
    _
  // Predicated region
  $region10: #{_lambda_.14} parent=0 // pred_check
    _
  $region11: #{_lambda_.14} parent=0 // pred_check_branch
    %15 = sbr.rel (0) target = $region13
  $region12: #{_lambda_.14} parent=0 // pred_region
    _
  $region13: #{_lambda_.14} parent=0 // pred_fallthru
    _
  // Predicated region
  $region14: #{_lambda_.14} parent=0 // pred_check
    _
  $region15: #{_lambda_.14} parent=0 // pred_check_branch
    %17 = sbr.rel (0) target = $region17
  $region16: #{_lambda_.14} parent=0 // pred_region
    _
  $region17: #{_lambda_.14} parent=0 // pred_fallthru
    _
  // Predicated region
  $region18: #{_lambda_.14} parent=0 // pred_check
    _
  $region19: #{_lambda_.14} parent=0 // pred_check_branch
    %19 = sbr.rel (0) target = $region21
  $region20: #{_lambda_.14} parent=0 // pred_region
    _
  $region21: #{_lambda_.14} parent=0 // pred_fallthru
    _
  %p21 = scmp.eq.s32.totalorder 0, 0
  // Predicated region
  $region22: #{_lambda_.14} parent=0 // pred_check
    %p22 = pneg %p21
  $region23: #{_lambda_.14} parent=0 // pred_check_branch
    %24 = sbr.rel (%p22) target = $region25
  $region24: #{_lambda_.14} parent=0 // pred_region
    %v25 = vld [vmem:[%s0] sm:$0xf]
    %v26 = vld [vmem:[%s0 + $0x4] sm:$0xf]
    %v27 = vunpack.c.l.bf16 %v25
    %v28 = vunpack.c.l.bf16 %v26
    %vm29 = vcmask 261120
    %v30 = vsel %vm29, %v27, 0.0
    %31 = vadd.xlane.f32.xlu0 %v30
    %v32 = vpop.xlane.xlu0 %31
    %v33 = vsel %vm29, %v28, 0.0
    %34 = vadd.xlane.f32.xlu0 %v33
    %v35 = vpop.xlane.xlu0 %34
    %v36 = vrcp.pop 32.0
    %v37 = vmul.f32 %v32, %v36
    %v38 = vmul.f32 %v35, %v36
    %v39 = vsub.f32 %v27, %v37
    %v40 = vsub.f32 %v28, %v38
    %v41 = vmul.f32 %v39, %v39
    %v42 = vmul.f32 %v40, %v40
    %v43 = vsel %vm29, %v41, 0.0
    %44 = vadd.xlane.f32.xlu0 %v43
    %v45 = vpop.xlane.xlu0 %44
    %v46 = vsel %vm29, %v42, 0.0
    %47 = vadd.xlane.f32.xlu0 %v46
    %v48 = vpop.xlane.xlu0 %47
    %v49 = vmul.f32 %v45, %v36
    %v50 = vmul.f32 %v48, %v36
    %v51 = vadd.f32 %v49, 1e-05
    %v52 = vadd.f32 %v50, 1e-05
    %v53 = vrsqrt.pop %v51
    %v54 = vrsqrt.pop %v52
    %v55 = vmul.f32 %v39, %v53
    %v56 = vmul.f32 %v40, %v54
    %v57 = vld [vmem:[%s2] sm:$0x1]
    %v59 = vlaneseq
    %v60 = vshrl.u32 %v59, 7
    %v61 = vsub.s32 0, %v60
    %v62 = vrot.slane %v57, %v61
    %v64 = vmul.f32 %v55, %v62
    %v65 = vmul.f32 %v56, %v62
    %v66 = vld [vmem:[%s3] sm:$0x1]
    %v68 = vlaneseq
    %v69 = vshrl.u32 %v68, 7
    %v70 = vsub.s32 0, %v69
    %v71 = vrot.slane %v66, %v70
    %v73 = vadd.f32 %v64, %v71
    %v74 = vadd.f32 %v65, %v71
    %v75 = vpack.c.bf16 %v74, %v73
    %76 = vst.msk [vmem:[#allocation2] sm:$0xff] %vm29, %v75
  $region25: #{_lambda_.14} parent=0 // pred_fallthru
    _
  %v77 = vld [vmem:[#allocation2] sm:$0xff]
  %v78 = vld [vmem:[%s1] sm:$0xf]
  %v79 = vld [vmem:[%s1 + $0x4] sm:$0xf]
  %v80 = vld [vmem:[%s1 + $0x8] sm:$0xf]
  %v81 = vld [vmem:[%s1 + $0xc] sm:$0xf]
  %v82 = vld [vmem:[%s4] sm:$0x1]
  %v84 = vlaneseq
  %v85 = vshrl.u32 %v84, 7
  %v86 = vsub.s32 0, %v85
  %v87 = vrot.slane %v82, %v86
  %v93 = vunpack.c.l.b16 %v78
  %v94 = vunpack.c.l.b16 %v79
  %v95 = vunpack.c.l.b16 %v80
  %v96 = vunpack.c.l.b16 %v81
  %v97 = vpack.c.b16 %v94, %v93
  %v98 = vpack.c.b16 %v96, %v95
  %vm101 = vcmask 261120
  %v103 = vsel %vm101, %v77, 0
  %105 = vmatprep.subr.bf16.mxu0 0
  %106 = vmatpush1.bf16.msra.mxu0 %v97
  %107 = vmatprep.subr.bf16.mxu0 0
  %108 = vmatpush1.bf16.msra.mxu0 %v98
  %109 = vmatprep.subr.bf16.mxu0 0
  %110 = vmatpush1.bf16.msra.mxu0 0
  %111 = vmatprep.subr.bf16.mxu0 0
  %112 = vmatpush1.bf16.msra.mxu0 0
  %113 = vmatprep.subr.bf16.mxu0 0
  %114 = vmatpush1.bf16.msra.mxu0 0
  %115 = vmatprep.subr.bf16.mxu0 0
  %116 = vmatpush1.bf16.msra.mxu0 0
  %117 = vmatprep.subr.bf16.mxu0 0
  %118 = vmatpush1.bf16.msra.mxu0 0
  %119 = vmatprep.subr.bf16.mxu0 0
  %120 = vmatpush1.bf16.msra.mxu0 0
  %121 = vmatprep.subr.bf16.mxu0 0
  %122 = vmatpush1.bf16.msra.mxu0 0
  %123 = vmatprep.subr.bf16.mxu0 0
  %124 = vmatpush1.bf16.msra.mxu0 0
  %125 = vmatprep.subr.bf16.mxu0 0
  %126 = vmatpush1.bf16.msra.mxu0 0
  %127 = vmatprep.subr.bf16.mxu0 0
  %128 = vmatpush1.bf16.msra.mxu0 0
  %129 = vmatprep.subr.bf16.mxu0 0
  %130 = vmatpush1.bf16.msra.mxu0 0
  %131 = vmatprep.subr.bf16.mxu0 0
  %132 = vmatpush1.bf16.msra.mxu0 0
  %133 = vmatprep.subr.bf16.mxu0 0
  %134 = vmatpush1.bf16.msra.mxu0 0
  %135 = vmatprep.subr.bf16.mxu0 0
  %136 = vmatpush1.bf16.msra.mxu0 0
  %137 = vmatprep.mubr.bf16.mxu0 0
  %138 = vmatmul.mubr.bf16.gmra.mrb[0].mxu0 %v103
  %v139 = vpop.f32.mrb[0].mxu0
  %v140 = vadd.f32 %v87, %v139
  %v141 = vpop.f32.mrb[0].mxu0
  %v142 = vpop.f32.mrb[0].mxu0
  %v143 = vadd.f32 %v87, %v142
  %v144 = vpop.f32.mrb[0].mxu0
  %145 = vdwg.mxu0
  %v146 = vmul.f32 %v140, 0.5
  %v147 = vmul.f32 %v143, 0.5
  %v148 = vmul.f32 %v140, 0.044715
  %v149 = vmul.f32 %v143, 0.044715
  %v150 = vmul.f32 %v148, %v140
  %v151 = vmul.f32 %v149, %v143
  %v152 = vmul.f32 %v150, %v140
  %v153 = vmul.f32 %v151, %v143
  %v154 = vadd.f32 %v140, %v152
  %v155 = vadd.f32 %v143, %v153
  %v156 = vmul.f32 %v154, 0.7978846
  %v157 = vmul.f32 %v155, 0.7978846
  %v158 = vtanh.pop %v156
  %v159 = vtanh.pop %v157
  %v160 = vadd.f32 %v158, 1.0
  %v161 = vadd.f32 %v159, 1.0
  %v162 = vmul.f32 %v146, %v160
  %v163 = vmul.f32 %v147, %v161
  %v164 = vpack.c.bf16 %v163, %v162
  %v166 = vunpack.c.l.b16 %v164
  %v167 = vunpack.c.h.b16 %v164
  %v168 = vpack.c.b16 %v166, %v166
  %v169 = vpack.c.b16 %v167, %v167
  %172 = vst [vmem:[%s5] sm:$0xf] %v168
  %173 = vst [vmem:[%s5 + $0x4] sm:$0xf] %v169
  // Predicated region
  $region26: #{_lambda_.14} parent=0 // pred_check
    _
  $region27: #{_lambda_.14} parent=0 // pred_check_branch
    %175 = sbr.rel (0) target = $region29
  $region28: #{_lambda_.14} parent=0 // pred_region
    _
  $region29: #{_lambda_.14} parent=0 // pred_fallthru
    _
  // Predicated region
  $region30: #{_lambda_.14} parent=0 // pred_check
    _
  $region31: #{_lambda_.14} parent=0 // pred_check_branch
    %177 = sbr.rel (0) target = $region33
  $region32: #{_lambda_.14} parent=0 // pred_region
    _
  $region33: #{_lambda_.14} parent=0 // pred_fallthru
    _

// kernel: _lambda_.15
$region0: #{_lambda_.15}
  #allocation0 [shape = 'u32[]', space=smem, size = 0x4, offset = 0x4, fixed_abs, tag = 'smem constant byte address 0x4 - core index']
  #allocation1 [shape = 'u32[144,128]{1,0:T(1,128)}', space=vmem, size = 0x12000, scoped, tag = 'internal scratch']
  %s0 = inlined_call_operand.vmem [shape: bf16[16,128], index: 0, kind: input, shape index: {}]
  %s1 = inlined_call_operand.vmem [shape: bf16[128,32], index: 1, kind: input, shape index: {}]
  %s2 = inlined_call_operand.vmem [shape: f32[1,32], index: 2, kind: input, shape index: {}]
  %s3 = inlined_call_operand.vmem [shape: bf16[16,32], index: 3, kind: input, shape index: {}]
  %s4 = inlined_call_operand.vmem [shape: bf16[16,32], index: 4, kind: output, shape index: {}]
  %s5 = sld [smem:[#allocation0]]
  $region26: #{_lambda_.15} parent=0
    _
  %s7 = ssub.s32 1, %s5
  %s8 = scalar_select 0, %s7, %s5
  // Predicated region
  $region2: #{_lambda_.15} parent=0 // pred_check
    _
  $region3: #{_lambda_.15} parent=0 // pred_check_branch
    %10 = sbr.rel (0) target = $region5
  $region4: #{_lambda_.15} parent=0 // pred_region
    _
  $region5: #{_lambda_.15} parent=0 // pred_fallthru
    _
  // Predicated region
  $region6: #{_lambda_.15} parent=0 // pred_check
    _
  $region7: #{_lambda_.15} parent=0 // pred_check_branch
    %12 = sbr.rel (0) target = $region9
  $region8: #{_lambda_.15} parent=0 // pred_region
    _
  $region9: #{_lambda_.15} parent=0 // pred_fallthru
    _
  // Predicated region
  $region10: #{_lambda_.15} parent=0 // pred_check
    _
  $region11: #{_lambda_.15} parent=0 // pred_check_branch
    %14 = sbr.rel (0) target = $region13
  $region12: #{_lambda_.15} parent=0 // pred_region
    _
  $region13: #{_lambda_.15} parent=0 // pred_fallthru
    _
  // Predicated region
  $region14: #{_lambda_.15} parent=0 // pred_check
    _
  $region15: #{_lambda_.15} parent=0 // pred_check_branch
    %16 = sbr.rel (0) target = $region17
  $region16: #{_lambda_.15} parent=0 // pred_region
    _
  $region17: #{_lambda_.15} parent=0 // pred_fallthru
    _
  %v18 = vld [vmem:[%s0] sm:$0xf]
  %v19 = vld [vmem:[%s0 + $0x4] sm:$0xf]
  %v20 = vld [vmem:[%s1] sm:$0xf]
  %v21 = vld [vmem:[%s1 + $0x4] sm:$0xf]
  %v22 = vld [vmem:[%s1 + $0x8] sm:$0xf]
  %v23 = vld [vmem:[%s1 + $0xc] sm:$0xf]
  %v24 = vld [vmem:[%s1 + $0x10] sm:$0xf]
  %v25 = vld [vmem:[%s1 + $0x14] sm:$0xf]
  %v26 = vld [vmem:[%s1 + $0x18] sm:$0xf]
  %v27 = vld [vmem:[%s1 + $0x1c] sm:$0xf]
  %v28 = vld [vmem:[%s1 + $0x20] sm:$0xf]
  %v29 = vld [vmem:[%s1 + $0x24] sm:$0xf]
  %v30 = vld [vmem:[%s1 + $0x28] sm:$0xf]
  %v31 = vld [vmem:[%s1 + $0x2c] sm:$0xf]
  %v32 = vld [vmem:[%s1 + $0x30] sm:$0xf]
  %v33 = vld [vmem:[%s1 + $0x34] sm:$0xf]
  %v34 = vld [vmem:[%s1 + $0x38] sm:$0xf]
  %v35 = vld [vmem:[%s1 + $0x3c] sm:$0xf]
  %v36 = vld [vmem:[%s2] sm:$0x1]
  %v38 = vlaneseq
  %v39 = vshrl.u32 %v38, 7
  %v40 = vsub.s32 0, %v39
  %v41 = vrot.slane %v36, %v40
  %v45 = vunpack.c.l.b16 %v18
  %v46 = vunpack.c.l.b16 %v19
  %v47 = vpack.c.b16 %v46, %v45
  %v65 = vunpack.c.l.b16 %v20
  %v66 = vunpack.c.l.b16 %v21
  %v67 = vunpack.c.l.b16 %v22
  %v68 = vunpack.c.l.b16 %v23
  %v69 = vunpack.c.l.b16 %v24
  %v70 = vunpack.c.l.b16 %v25
  %v71 = vunpack.c.l.b16 %v26
  %v72 = vunpack.c.l.b16 %v27
  %v73 = vunpack.c.l.b16 %v28
  %v74 = vunpack.c.l.b16 %v29
  %v75 = vunpack.c.l.b16 %v30
  %v76 = vunpack.c.l.b16 %v31
  %v77 = vunpack.c.l.b16 %v32
  %v78 = vunpack.c.l.b16 %v33
  %v79 = vunpack.c.l.b16 %v34
  %v80 = vunpack.c.l.b16 %v35
  %v81 = vpack.c.b16 %v66, %v65
  %v82 = vpack.c.b16 %v68, %v67
  %v83 = vpack.c.b16 %v70, %v69
  %v84 = vpack.c.b16 %v72, %v71
  %v85 = vpack.c.b16 %v74, %v73
  %v86 = vpack.c.b16 %v76, %v75
  %v87 = vpack.c.b16 %v78, %v77
  %v88 = vpack.c.b16 %v80, %v79
  %97 = vmatprep.subr.bf16.mxu0 0
  %98 = vmatpush1.bf16.msra.mxu0 %v81
  %99 = vmatprep.subr.bf16.mxu0 0
  %100 = vmatpush1.bf16.msra.mxu0 %v82
  %101 = vmatprep.subr.bf16.mxu0 0
  %102 = vmatpush1.bf16.msra.mxu0 %v83
  %103 = vmatprep.subr.bf16.mxu0 0
  %104 = vmatpush1.bf16.msra.mxu0 %v84
  %105 = vmatprep.subr.bf16.mxu0 0
  %106 = vmatpush1.bf16.msra.mxu0 %v85
  %107 = vmatprep.subr.bf16.mxu0 0
  %108 = vmatpush1.bf16.msra.mxu0 %v86
  %109 = vmatprep.subr.bf16.mxu0 0
  %110 = vmatpush1.bf16.msra.mxu0 %v87
  %111 = vmatprep.subr.bf16.mxu0 0
  %112 = vmatpush1.bf16.msra.mxu0 %v88
  %113 = vmatprep.subr.bf16.mxu0 0
  %114 = vmatpush1.bf16.msra.mxu0 0
  %115 = vmatprep.subr.bf16.mxu0 0
  %116 = vmatpush1.bf16.msra.mxu0 0
  %117 = vmatprep.subr.bf16.mxu0 0
  %118 = vmatpush1.bf16.msra.mxu0 0
  %119 = vmatprep.subr.bf16.mxu0 0
  %120 = vmatpush1.bf16.msra.mxu0 0
  %121 = vmatprep.subr.bf16.mxu0 0
  %122 = vmatpush1.bf16.msra.mxu0 0
  %123 = vmatprep.subr.bf16.mxu0 0
  %124 = vmatpush1.bf16.msra.mxu0 0
  %125 = vmatprep.subr.bf16.mxu0 0
  %126 = vmatpush1.bf16.msra.mxu0 0
  %127 = vmatprep.subr.bf16.mxu0 0
  %128 = vmatpush1.bf16.msra.mxu0 0
  %129 = vmatprep.mubr.bf16.mxu0 0
  %130 = vmatmul.mubr.bf16.gmra.mrb[0].mxu0 %v47
  %v131 = vpop.f32.mrb[0].mxu0
  %v132 = vadd.f32 %v41, %v131
  %v133 = vpop.f32.mrb[0].mxu0
  %v134 = vpop.f32.mrb[0].mxu0
  %v135 = vadd.f32 %v41, %v134
  %v136 = vpop.f32.mrb[0].mxu0
  %137 = vdwg.mxu0
  %v138 = vld [vmem:[%s3] sm:$0xf]
  %v139 = vld [vmem:[%s3 + $0x4] sm:$0xf]
  %v140 = vunpack.c.l.bf16 %v138
  %v141 = vunpack.c.l.bf16 %v139
  %v142 = vadd.f32 %v132, %v140
  %v143 = vadd.f32 %v135, %v141
  %v144 = vpack.c.bf16 %v143, %v142
  %v146 = vunpack.c.l.b16 %v144
  %v147 = vunpack.c.h.b16 %v144
  %v148 = vpack.c.b16 %v146, %v146
  %v149 = vpack.c.b16 %v147, %v147
  %vm152 = vcmask 257024
  %153 = vst.msk [vmem:[%s4] sm:$0xf] %vm152, %v148
  %154 = vst.msk [vmem:[%s4 + $0x4] sm:$0xf] %vm152, %v149
  // Predicated region
  $region18: #{_lambda_.15} parent=0 // pred_check
    _
  $region19: #{_lambda_.15} parent=0 // pred_check_branch
    %156 = sbr.rel (0) target = $region21
  $region20: #{_lambda_.15} parent=0 // pred_region
    _
  $region21: #{_lambda_.15} parent=0 // pred_fallthru
    _
  // Predicated region
  $region22: #{_lambda_.15} parent=0 // pred_check
    _
  $region23: #{_lambda_.15} parent=0 // pred_check_branch
    %158 = sbr.rel (0) target = $region25
  $region24: #{_lambda_.15} parent=0 // pred_region
    _
  $region25: #{_lambda_.15} parent=0 // pred_fallthru
    _

// kernel: _lambda_.21
$region0: #{_lambda_.21}
  #allocation0 [shape = 'u32[]', space=smem, size = 0x4, offset = 0x4, fixed_abs, tag = 'smem constant byte address 0x4 - core index']
  #allocation1 [shape = 'u32[144,128]{1,0:T(1,128)}', space=vmem, size = 0x12000, scoped, tag = 'internal scratch']
  #allocation2 [shape = 'bf16[16,32]{1,0:T(16,128)(2,1)}', space=vmem, size = 0x1000, scoped, tag = 'scratch operand']
  %s0 = inlined_call_operand.vmem [shape: bf16[16,32], index: 0, kind: input, shape index: {}]
  %s1 = inlined_call_operand.vmem [shape: bf16[32,128], index: 1, kind: input, shape index: {}]
  %s2 = inlined_call_operand.vmem [shape: f32[1,32], index: 2, kind: input, shape index: {}]
  %s3 = inlined_call_operand.vmem [shape: f32[1,32], index: 3, kind: input, shape index: {}]
  %s4 = inlined_call_operand.hbm [shape: f32[16,128], index: 4, kind: output, shape index: {}]
  %s5 = sld [smem:[#allocation0]]
  $region30: #{_lambda_.21} parent=0
    _
  %s7 = ssub.s32 1, %s5
  %s8 = scalar_select 0, %s7, %s5
  $region1: #{_lambda_.21} parent=0
    #allocation3 [shape = 'u8[8192]{0}', space=vmem, size = 0x2000, scoped, tag = 'output window, operand 0, single buffered']
    #allocation4 [shape = 's32[1]{0}', space=sflag, size = 0x4, scoped, tag = 'scoped memory for _lambda_.21']
    %9 = vsyncpa [#allocation4], 0
    // Predicated region
    $region2: #{_lambda_.21} parent=1 // pred_check
      _
    $region3: #{_lambda_.21} parent=1 // pred_check_branch
      %11 = sbr.rel (0) target = $region5
    $region4: #{_lambda_.21} parent=1 // pred_region
      _
    $region5: #{_lambda_.21} parent=1 // pred_fallthru
      _
    // Predicated region
    $region6: #{_lambda_.21} parent=1 // pred_check
      _
    $region7: #{_lambda_.21} parent=1 // pred_check_branch
      %13 = sbr.rel (0) target = $region9
    $region8: #{_lambda_.21} parent=1 // pred_region
      _
    $region9: #{_lambda_.21} parent=1 // pred_fallthru
      _
    // Predicated region
    $region10: #{_lambda_.21} parent=1 // pred_check
      _
    $region11: #{_lambda_.21} parent=1 // pred_check_branch
      %15 = sbr.rel (0) target = $region13
    $region12: #{_lambda_.21} parent=1 // pred_region
      _
    $region13: #{_lambda_.21} parent=1 // pred_fallthru
      _
    // Predicated region
    $region14: #{_lambda_.21} parent=1 // pred_check
      _
    $region15: #{_lambda_.21} parent=1 // pred_check_branch
      %17 = sbr.rel (0) target = $region17
    $region16: #{_lambda_.21} parent=1 // pred_region
      _
    $region17: #{_lambda_.21} parent=1 // pred_fallthru
      _
    %p19 = scmp.eq.s32.totalorder 0, 0
    // Predicated region
    $region18: #{_lambda_.21} parent=1 // pred_check
      %p20 = pneg %p19
    $region19: #{_lambda_.21} parent=1 // pred_check_branch
      %22 = sbr.rel (%p20) target = $region21
    $region20: #{_lambda_.21} parent=1 // pred_region
      %v23 = vld [vmem:[%s0] sm:$0xf]
      %v24 = vld [vmem:[%s0 + $0x4] sm:$0xf]
      %v25 = vunpack.c.l.bf16 %v23
      %v26 = vunpack.c.l.bf16 %v24
      %vm27 = vcmask 261120
      %v28 = vsel %vm27, %v25, 0.0
      %29 = vadd.xlane.f32.xlu0 %v28
      %v30 = vpop.xlane.xlu0 %29
      %v31 = vsel %vm27, %v26, 0.0
      %32 = vadd.xlane.f32.xlu0 %v31
      %v33 = vpop.xlane.xlu0 %32
      %v34 = vrcp.pop 32.0
      %v35 = vmul.f32 %v30, %v34
      %v36 = vmul.f32 %v33, %v34
      %v37 = vsub.f32 %v25, %v35
      %v38 = vsub.f32 %v26, %v36
      %v39 = vmul.f32 %v37, %v37
      %v40 = vmul.f32 %v38, %v38
      %v41 = vsel %vm27, %v39, 0.0
      %42 = vadd.xlane.f32.xlu0 %v41
      %v43 = vpop.xlane.xlu0 %42
      %v44 = vsel %vm27, %v40, 0.0
      %45 = vadd.xlane.f32.xlu0 %v44
      %v46 = vpop.xlane.xlu0 %45
      %v47 = vmul.f32 %v43, %v34
      %v48 = vmul.f32 %v46, %v34
      %v49 = vadd.f32 %v47, 1e-05
      %v50 = vadd.f32 %v48, 1e-05
      %v51 = vrsqrt.pop %v49
      %v52 = vrsqrt.pop %v50
      %v53 = vmul.f32 %v37, %v51
      %v54 = vmul.f32 %v38, %v52
      %v55 = vld [vmem:[%s2] sm:$0x1]
      %v57 = vlaneseq
      %v58 = vshrl.u32 %v57, 7
      %v59 = vsub.s32 0, %v58
      %v60 = vrot.slane %v55, %v59
      %v62 = vmul.f32 %v53, %v60
      %v63 = vmul.f32 %v54, %v60
      %v64 = vld [vmem:[%s3] sm:$0x1]
      %v66 = vlaneseq
      %v67 = vshrl.u32 %v66, 7
      %v68 = vsub.s32 0, %v67
      %v69 = vrot.slane %v64, %v68
      %v71 = vadd.f32 %v62, %v69
      %v72 = vadd.f32 %v63, %v69
      %v73 = vpack.c.bf16 %v72, %v71
      %74 = vst.msk [vmem:[#allocation2] sm:$0xff] %vm27, %v73
    $region21: #{_lambda_.21} parent=1 // pred_fallthru
      _
    %v75 = vld [vmem:[#allocation2] sm:$0xff]
    %v76 = vld [vmem:[%s1] sm:$0xf]
    %v77 = vld [vmem:[%s1 + $0x4] sm:$0xf]
    %v78 = vld [vmem:[%s1 + $0x8] sm:$0xf]
    %v79 = vld [vmem:[%s1 + $0xc] sm:$0xf]
    %v84 = vunpack.c.l.b16 %v76
    %v85 = vunpack.c.l.b16 %v77
    %v86 = vunpack.c.l.b16 %v78
    %v87 = vunpack.c.l.b16 %v79
    %v88 = vpack.c.b16 %v85, %v84
    %v89 = vpack.c.b16 %v87, %v86
    %vm92 = vcmask 261120
    %v94 = vsel %vm92, %v75, 0
    %96 = vmatprep.subr.bf16.mxu0 0
    %97 = vmatpush1.bf16.msra.mxu0 %v88
    %98 = vmatprep.subr.bf16.mxu0 0
    %99 = vmatpush1.bf16.msra.mxu0 %v89
    %100 = vmatprep.subr.bf16.mxu0 0
    %101 = vmatpush1.bf16.msra.mxu0 0
    %102 = vmatprep.subr.bf16.mxu0 0
    %103 = vmatpush1.bf16.msra.mxu0 0
    %104 = vmatprep.subr.bf16.mxu0 0
    %105 = vmatpush1.bf16.msra.mxu0 0
    %106 = vmatprep.subr.bf16.mxu0 0
    %107 = vmatpush1.bf16.msra.mxu0 0
    %108 = vmatprep.subr.bf16.mxu0 0
    %109 = vmatpush1.bf16.msra.mxu0 0
    %110 = vmatprep.subr.bf16.mxu0 0
    %111 = vmatpush1.bf16.msra.mxu0 0
    %112 = vmatprep.subr.bf16.mxu0 0
    %113 = vmatpush1.bf16.msra.mxu0 0
    %114 = vmatprep.subr.bf16.mxu0 0
    %115 = vmatpush1.bf16.msra.mxu0 0
    %116 = vmatprep.subr.bf16.mxu0 0
    %117 = vmatpush1.bf16.msra.mxu0 0
    %118 = vmatprep.subr.bf16.mxu0 0
    %119 = vmatpush1.bf16.msra.mxu0 0
    %120 = vmatprep.subr.bf16.mxu0 0
    %121 = vmatpush1.bf16.msra.mxu0 0
    %122 = vmatprep.subr.bf16.mxu0 0
    %123 = vmatpush1.bf16.msra.mxu0 0
    %124 = vmatprep.subr.bf16.mxu0 0
    %125 = vmatpush1.bf16.msra.mxu0 0
    %126 = vmatprep.subr.bf16.mxu0 0
    %127 = vmatpush1.bf16.msra.mxu0 0
    %128 = vmatprep.mubr.bf16.mxu0 0
    %129 = vmatmul.mubr.bf16.gmra.mrb[0].mxu0 %v94
    %v130 = vpop.f32.mrb[0].mxu0
    %v131 = vadd.f32 0.0, %v130
    %v132 = vpop.f32.mrb[0].mxu0
    %v133 = vpop.f32.mrb[0].mxu0
    %v134 = vadd.f32 0.0, %v133
    %v135 = vpop.f32.mrb[0].mxu0
    %136 = vdwg.mxu0
    %137 = vst [vmem:[#allocation3] sm:$0xff] %v131
    %138 = vst [vmem:[#allocation3 + $0x8] sm:$0xff] %v134
    // Predicated region
    $region22: #{_lambda_.21} parent=1 // pred_check
      _
    $region23: #{_lambda_.21} parent=1 // pred_check_branch
      %140 = sbr.rel (0) target = $region25
    $region24: #{_lambda_.21} parent=1 // pred_region
      %s142 = ssub.s32 256, 256
      %143 = vsyncadd [#allocation4], %s142
      %s144 = sshll.u32 [#allocation3], 4
      %s145 = int_to_ptr.vmem [resolvable:$true] %s144
      %150 = dma.vmem_to_hbm [thread:$0]  %s145, 256, %s4, [#allocation4], 128, 128, 8
    $region25: #{_lambda_.21} parent=1 // pred_fallthru
      _
    // Predicated region
    $region26: #{_lambda_.21} parent=1 // pred_check
      _
    $region27: #{_lambda_.21} parent=1 // pred_check_branch
      %152 = sbr.rel (0) target = $region29
    $region28: #{_lambda_.21} parent=1 // pred_region
      %153 = dma.done [#allocation4], 256
    $region29: #{_lambda_.21} parent=1 // pred_fallthru
      _
    %154 = vsyncpa [#allocation4], 1

</llo_original>
